<compile_context>
chip_gen: v5e
topology: v5e:2x2
jax: 0.10.0
libtpu: 0.0.40
codegen_flags: <defaults>
</compile_context>

<pallas_src>
import functools

import jax
import jax.numpy as jnp
from jax.experimental import pallas as pl
from jax.experimental.pallas import tpu as pltpu


HIDDEN = 768
CLASSES = 61        # real classes produced by the final Linear(768, 61)
CLASSES_PAD = 128   # lane-dense (multiple-of-128) padded class dimension
NEG_BIG = -1e30     # padded-logit f32 bias -> exp underflows to exactly 0


def _cdiv(a, b):
    return -(-a // b)


def _round_up(x, m):
    return ((x + m - 1) // m) * m


# Detect once whether BlockSpec accepts pipeline_mode=pl.Buffered(1) so the
# resident weights can be single-buffered; otherwise fall back silently.
try:
    pl.BlockSpec((8, 128), lambda i: (0, 0), pipeline_mode=pl.Buffered(1))
    _SINGLE_BUFFER_WEIGHTS = True
except Exception:  # pragma: no cover - depends on installed jax version
    _SINGLE_BUFFER_WEIGHTS = False


def _tensorcores_per_chip():
    """Best-effort TensorCores-per-chip (2 on v7x, 1 on v5e/v6e); default 1."""
    try:
        info = pltpu.get_tpu_info()
    except Exception:
        return 1
    for attr in ("num_tensorcores", "tensorcore_count", "num_cores",
                 "cores_per_chip", "num_cores_per_chip"):
        v = getattr(info, attr, None)
        if isinstance(v, int) and v > 0:
            return v
    return 1


def _resident_spec(block_shape):
    """Constant-index (grid-resident) BlockSpec, single-buffered if possible."""
    index_map = lambda i: (0,) * len(block_shape)
    if _SINGLE_BUFFER_WEIGHTS:
        return pl.BlockSpec(block_shape, index_map, pipeline_mode=pl.Buffered(1))
    return pl.BlockSpec(block_shape, index_map)


def _vmem_limit_bytes(tm, d):
    """Scoped-VMEM limit derived from actual tile sizes (clamped 32..64 MiB)."""
    w_bufs = 1 if _SINGLE_BUFFER_WEIGHTS else 2
    x_b = 2 * tm * d * 2                            # bf16 x tile, double-buffered
    o_b = 2 * tm * CLASSES_PAD * 4                  # f32 out tile, double-buffered
    w_b = w_bufs * ((d * HIDDEN + HIDDEN * HIDDEN + HIDDEN * CLASSES_PAD) * 2
                    + (2 * HIDDEN + CLASSES_PAD) * 4)
    t_b = 2 * tm * HIDDEN * (4 + 2) + 3 * tm * CLASSES_PAD * 4  # h1/h2 + softmax temps
    total = x_b + o_b + w_b + t_b
    return int(min(max(total * 3 // 2 + (8 << 20), 32 << 20), 64 << 20))


def _discriminator_kernel(x_ref, w1_ref, b1_ref, w2_ref, b2_ref, w3_ref, b3_ref,
                          out_ref):
    """One row-tile of the MLP + softmax, fully in VMEM.

    x_ref  : (tm, D)    bf16 input rows
    w1_ref : (D, 768)   bf16    b1_ref: (1, 768)  f32
    w2_ref : (768, 768) bf16    b2_ref: (1, 768)  f32
    w3_ref : (768, 128) bf16    b3_ref: (1, 128)  f32 (cols >= 61 are -1e30)
    out_ref: (tm, 128)  f32 softmax probabilities (cols >= 61 are exactly 0)
    """
    x = x_ref[...]

    # Linear 1 (MXU, f32 accumulate) + f32 bias, then LeakyReLU in bf16.
    h1 = jnp.dot(x, w1_ref[...], preferred_element_type=jnp.float32) + b1_ref[...]
    h1 = h1.astype(jnp.bfloat16)
    h1 = jnp.maximum(h1, h1 * 0.01)

    # Linear 2 + LeakyReLU.
    h2 = jnp.dot(h1, w2_ref[...], preferred_element_type=jnp.float32) + b2_ref[...]
    h2 = h2.astype(jnp.bfloat16)
    h2 = jnp.maximum(h2, h2 * 0.01)

    # Linear 3 (logits). Padded class columns get bias -1e30 -> softmax exact 0.
    logits = jnp.dot(h2, w3_ref[...], preferred_element_type=jnp.float32) + b3_ref[...]

    # Numerically-stable softmax over the (padded) class axis, exact divide so
    # rows sum to 1 within f32 rounding.
    m = jnp.max(logits, axis=-1, keepdims=True)
    e = jnp.exp(logits - m)
    denom = jnp.sum(e, axis=-1, keepdims=True)
    out_ref[...] = (e * (1.0 / denom)).astype(out_ref.dtype)


@functools.partial(jax.jit, static_argnames=("block_rows",))
def discriminator_forward(x, params, block_rows=1024):
    """x: (b, n, d) float32 -> probs: (b*n, 61) float32."""
    b, n, d = x.shape
    m = b * n
    x2 = x.reshape(m, d).astype(jnp.bfloat16)   # bf16 input: half the DMA/VMEM

    # --- Balanced row tiling -------------------------------------------------
    m16 = max(16, _round_up(m, 16))             # bf16 sublane packing = 16
    ntiles = _cdiv(m16, block_rows)
    num_tc = _tensorcores_per_chip()
    if num_tc >= 2:
        # Only split for megacore on multi-TC chips (v7x); keep step count a
        # multiple of the TC count so both cores get equal work.
        if ntiles == 1 and m16 >= 256:
            ntiles = num_tc
        elif ntiles % num_tc:
            ntiles = _round_up(ntiles, num_tc)
    tm = _round_up(_cdiv(m16, ntiles), 16)
    m_pad = ntiles * tm
    if m_pad != m:
        # Zero rows of padding produce finite probs; sliced off below.
        x2 = jnp.pad(x2, ((0, m_pad - m), (0, 0)))

    # --- Parameters ----------------------------------------------------------
    w1, b1, w2, b2, w3, b3 = params
    w1 = w1.astype(jnp.bfloat16)
    w2 = w2.astype(jnp.bfloat16)
    # Pad classes 61 -> 128: zero weight columns, -1e30 f32 bias, so padded
    # logits contribute exactly 0 to the softmax and the output is lane-dense.
    w3 = jnp.pad(w3, ((0, 0), (0, CLASSES_PAD - CLASSES))).astype(jnp.bfloat16)
    b1 = b1.reshape(1, HIDDEN).astype(jnp.float32)
    b2 = b2.reshape(1, HIDDEN).astype(jnp.float32)
    b3 = jnp.pad(b3.reshape(1, CLASSES), ((0, 0), (0, CLASSES_PAD - CLASSES)),
                 constant_values=NEG_BIG).astype(jnp.float32)

    grid = (ntiles,)

    # Advisory cost estimate for the XLA scheduler.
    weight_bytes = (d * HIDDEN + HIDDEN * HIDDEN + HIDDEN * CLASSES_PAD) * 2 \
        + (2 * HIDDEN + CLASSES_PAD) * 4
    cost = pl.CostEstimate(
        flops=2 * m_pad * (d * HIDDEN + HIDDEN * HIDDEN + HIDDEN * CLASSES_PAD),
        transcendentals=m_pad * CLASSES_PAD,
        bytes_accessed=m_pad * d * 2 + m_pad * CLASSES_PAD * 4 + weight_bytes,
    )

    out = pl.pallas_call(
        _discriminator_kernel,
        out_shape=jax.ShapeDtypeStruct((m_pad, CLASSES_PAD), jnp.float32),
        grid_spec=pltpu.PrefetchScalarGridSpec(
            num_scalar_prefetch=0,
            grid=grid,
            in_specs=[
                pl.BlockSpec((tm, d), lambda i: (i, 0)),     # x tile (bf16)
                _resident_spec((d, HIDDEN)),                  # W1 (resident)
                _resident_spec((1, HIDDEN)),                  # b1
                _resident_spec((HIDDEN, HIDDEN)),             # W2
                _resident_spec((1, HIDDEN)),                  # b2
                _resident_spec((HIDDEN, CLASSES_PAD)),        # W3 (padded)
                _resident_spec((1, CLASSES_PAD)),             # b3 (padded)
            ],
            out_specs=pl.BlockSpec((tm, CLASSES_PAD), lambda i: (i, 0)),
        ),
        compiler_params=pltpu.CompilerParams(
            dimension_semantics=("parallel",),
            vmem_limit_bytes=_vmem_limit_bytes(tm, d),
        ),
        cost_estimate=cost,
    )(x2, w1, b1, w2, b2, w3, b3)

    # Drop padded rows and padded class columns.
    return out[:m, :CLASSES]


def init_params(key, dim):
    """Deterministic synthetic parameters matching nn.Linear shapes.

    PyTorch stores Linear weight as (out, in); we store its transpose (in, out)
    so that y = x @ W + b gives identical results.
    """
    k1, k2, k3, k4, k5, k6 = jax.random.split(key, 6)

    def lin(kw, kb, fan_in, fan_out):
        bound = 1.0 / jnp.sqrt(fan_in)
        w = jax.random.uniform(kw, (fan_in, fan_out), jnp.float32, -bound, bound)
        b = jax.random.uniform(kb, (fan_out,), jnp.float32, -bound, bound)
        return w, b

    w1, b1 = lin(k1, k2, dim, HIDDEN)
    w2, b2 = lin(k3, k4, HIDDEN, HIDDEN)
    w3, b3 = lin(k5, k6, HIDDEN, CLASSES)
    return (w1, b1, w2, b2, w3, b3)


def _reference_forward(x, params):
    """Pure-JAX f32 reference of the PyTorch forward, for a sanity check."""
    b, n, d = x.shape
    w1, b1, w2, b2, w3, b3 = params
    h = x.reshape(-1, d)
    h = jnp.maximum(h @ w1 + b1, 0.01 * (h @ w1 + b1))
    h = jnp.maximum(h @ w2 + b2, 0.01 * (h @ w2 + b2))
    logits = h @ w3 + b3
    return jax.nn.softmax(logits, axis=-1)


if __name__ == "__main__":
    key = jax.random.PRNGKey(0)
    kx, kp, kx2 = jax.random.split(key, 3)

    # Small shapes consistent with forward(): input is (b, n, d).
    b, n, dim = 2, 8, 32
    x = jax.random.normal(kx, (b, n, dim), dtype=jnp.float32)
    params = init_params(kp, dim)

    probs = discriminator_forward(x, params)
    probs = jax.block_until_ready(probs)
    assert probs.shape == (b * n, CLASSES), probs.shape

    ref = _reference_forward(x, params)
    # bf16 matmul operands (f32 accumulation) -> small deviation vs f32 ref.
    assert jnp.allclose(probs, ref, atol=2e-3, rtol=0), float(
        jnp.max(jnp.abs(probs - ref)))
    # Exact softmax divide -> rows sum to 1 within f32 rounding.
    assert jnp.allclose(jnp.sum(probs, axis=-1), 1.0, atol=1e-3)

    # Second shape: ragged row count + multi-step grid (exercises row padding,
    # balanced tiling, class-dim slicing, and the parallel grid axis).
    b2_, n2_ = 2, 77
    x_b = jax.random.normal(kx2, (b2_, n2_, dim), dtype=jnp.float32)
    probs_b = discriminator_forward(x_b, params, block_rows=64)
    probs_b = jax.block_until_ready(probs_b)
    assert probs_b.shape == (b2_ * n2_, CLASSES), probs_b.shape
    ref_b = _reference_forward(x_b, params)
    assert jnp.allclose(probs_b, ref_b, atol=2e-3, rtol=0), float(
        jnp.max(jnp.abs(probs_b - ref_b)))
    assert jnp.allclose(jnp.sum(probs_b, axis=-1), 1.0, atol=1e-3)

    print("KERNEL_OK")
</pallas_src>

<mosaic_0001>
module attributes {stable_mosaic.version = 11 : i64} {
  func.func @_discriminator_kernel(%arg0: i32, %arg1: memref<16x32xbf16, #tpu.memory_space<vmem>>, %arg2: memref<32x768xbf16, #tpu.memory_space<vmem>>, %arg3: memref<1x768xf32, #tpu.memory_space<vmem>>, %arg4: memref<768x768xbf16, #tpu.memory_space<vmem>>, %arg5: memref<1x768xf32, #tpu.memory_space<vmem>>, %arg6: memref<768x128xbf16, #tpu.memory_space<vmem>>, %arg7: memref<1x128xf32, #tpu.memory_space<vmem>>, %arg8: memref<16x128xf32, #tpu.memory_space<vmem>>) attributes {dimension_semantics = [#tpu.dimension_semantics<parallel>], iteration_bounds = array<i64: 1>, scalar_prefetch = 0 : i64, scratch_operands = 0 : i64, tpu.core_type = #tpu.core_type<tc>, window_params = [{transform_indices = @transform_0, window_bounds = array<i64: 16, 32>}, {pipeline_mode = #tpu.pipeline_mode<synchronous>, transform_indices = @transform_1, window_bounds = array<i64: 32, 768>}, {pipeline_mode = #tpu.pipeline_mode<synchronous>, transform_indices = @transform_2, window_bounds = array<i64: 1, 768>}, {pipeline_mode = #tpu.pipeline_mode<synchronous>, transform_indices = @transform_3, window_bounds = array<i64: 768, 768>}, {pipeline_mode = #tpu.pipeline_mode<synchronous>, transform_indices = @transform_4, window_bounds = array<i64: 1, 768>}, {pipeline_mode = #tpu.pipeline_mode<synchronous>, transform_indices = @transform_5, window_bounds = array<i64: 768, 128>}, {pipeline_mode = #tpu.pipeline_mode<synchronous>, transform_indices = @transform_6, window_bounds = array<i64: 1, 128>}, {transform_indices = @transform_7, window_bounds = array<i64: 16, 128>}]} {
    %c0 = arith.constant 0 : index
    %c0_0 = arith.constant 0 : index
    %0 = vector.load %arg1[%c0, %c0_0] : memref<16x32xbf16, #tpu.memory_space<vmem>>, vector<16x32xbf16>
    %c0_1 = arith.constant 0 : index
    %c0_2 = arith.constant 0 : index
    %1 = vector.load %arg2[%c0_1, %c0_2] : memref<32x768xbf16, #tpu.memory_space<vmem>>, vector<32x768xbf16>
    %cst = arith.constant dense<0.000000e+00> : vector<16x768xf32>
    %2 = tpu.matmul %0, %1, %cst {dimension_numbers = #tpu.dot_dimension_numbers<[1], [0], [0], [1], [0, 0, 1, 1], [], []>} : vector<16x32xbf16>, vector<32x768xbf16>, vector<16x768xf32> -> vector<16x768xf32>
    %c0_3 = arith.constant 0 : index
    %c0_4 = arith.constant 0 : index
    %3 = vector.load %arg3[%c0_3, %c0_4] : memref<1x768xf32, #tpu.memory_space<vmem>>, vector<1x768xf32>
    %4 = vector.broadcast %3 : vector<1x768xf32> to vector<16x768xf32>
    %5 = arith.addf %2, %4 : vector<16x768xf32>
    %6 = arith.truncf %5 : vector<16x768xf32> to vector<16x768xbf16>
    %cst_5 = arith.constant 1.000980e-02 : bf16
    %7 = vector.broadcast %cst_5 : bf16 to vector<16x768xbf16>
    %8 = arith.mulf %6, %7 : vector<16x768xbf16>
    %9 = arith.maximumf %6, %8 : vector<16x768xbf16>
    %c0_6 = arith.constant 0 : index
    %c0_7 = arith.constant 0 : index
    %10 = vector.load %arg4[%c0_6, %c0_7] : memref<768x768xbf16, #tpu.memory_space<vmem>>, vector<768x768xbf16>
    %cst_8 = arith.constant dense<0.000000e+00> : vector<16x768xf32>
    %11 = tpu.matmul %9, %10, %cst_8 {dimension_numbers = #tpu.dot_dimension_numbers<[1], [0], [0], [1], [0, 0, 1, 1], [], []>} : vector<16x768xbf16>, vector<768x768xbf16>, vector<16x768xf32> -> vector<16x768xf32>
    %c0_9 = arith.constant 0 : index
    %c0_10 = arith.constant 0 : index
    %12 = vector.load %arg5[%c0_9, %c0_10] : memref<1x768xf32, #tpu.memory_space<vmem>>, vector<1x768xf32>
    %13 = vector.broadcast %12 : vector<1x768xf32> to vector<16x768xf32>
    %14 = arith.addf %11, %13 : vector<16x768xf32>
    %15 = arith.truncf %14 : vector<16x768xf32> to vector<16x768xbf16>
    %cst_11 = arith.constant 1.000980e-02 : bf16
    %16 = vector.broadcast %cst_11 : bf16 to vector<16x768xbf16>
    %17 = arith.mulf %15, %16 : vector<16x768xbf16>
    %18 = arith.maximumf %15, %17 : vector<16x768xbf16>
    %c0_12 = arith.constant 0 : index
    %c0_13 = arith.constant 0 : index
    %19 = vector.load %arg6[%c0_12, %c0_13] : memref<768x128xbf16, #tpu.memory_space<vmem>>, vector<768x128xbf16>
    %cst_14 = arith.constant dense<0.000000e+00> : vector<16x128xf32>
    %20 = tpu.matmul %18, %19, %cst_14 {dimension_numbers = #tpu.dot_dimension_numbers<[1], [0], [0], [1], [0, 0, 1, 1], [], []>} : vector<16x768xbf16>, vector<768x128xbf16>, vector<16x128xf32> -> vector<16x128xf32>
    %c0_15 = arith.constant 0 : index
    %c0_16 = arith.constant 0 : index
    %21 = vector.load %arg7[%c0_15, %c0_16] : memref<1x128xf32, #tpu.memory_space<vmem>>, vector<1x128xf32>
    %22 = vector.broadcast %21 : vector<1x128xf32> to vector<16x128xf32>
    %23 = arith.addf %20, %22 : vector<16x128xf32>
    %cst_17 = arith.constant dense<0xFF800000> : vector<16xf32>
    %24 = vector.multi_reduction <maximumf>, %23, %cst_17 [1] : vector<16x128xf32> to vector<16xf32>
    %25 = vector.shape_cast %24 : vector<16xf32> to vector<16x1xf32>
    %26 = vector.broadcast %25 : vector<16x1xf32> to vector<16x128xf32>
    %27 = arith.subf %23, %26 : vector<16x128xf32>
    %28 = math.exp %27 : vector<16x128xf32>
    %cst_18 = arith.constant dense<0.000000e+00> : vector<16xf32>
    %29 = vector.multi_reduction <add>, %28, %cst_18 [1] : vector<16x128xf32> to vector<16xf32>
    %30 = vector.shape_cast %29 : vector<16xf32> to vector<16x1xf32>
    %cst_19 = arith.constant 1.000000e+00 : f32
    %31 = vector.broadcast %cst_19 : f32 to vector<16x1xf32>
    %32 = arith.divf %31, %30 : vector<16x1xf32>
    %33 = vector.broadcast %32 : vector<16x1xf32> to vector<16x128xf32>
    %34 = arith.mulf %28, %33 : vector<16x128xf32>
    %c0_20 = arith.constant 0 : index
    %c0_21 = arith.constant 0 : index
    %35 = vector.load %arg8[%c0_20, %c0_21] : memref<16x128xf32, #tpu.memory_space<vmem>>, vector<16x128xf32>
    tpu.vector_store %arg8[%c0_20, %c0_21], %34 {strides = array<i32>} : memref<16x128xf32, #tpu.memory_space<vmem>>, vector<16x128xf32>,
    return
  }
  func.func @transform_0(%arg0: i32) -> (i32, i32) {
    %c0_i32 = arith.constant 0 : i32
    %c0_i32_0 = arith.constant 0 : i32
    return %arg0, %c0_i32 : i32, i32
  }
  func.func @transform_1(%arg0: i32) -> (i32, i32) {
    %c0_i32 = arith.constant 0 : i32
    %c0_i32_0 = arith.constant 0 : i32
    %c0_i32_1 = arith.constant 0 : i32
    return %c0_i32, %c0_i32_0 : i32, i32
  }
  func.func @transform_2(%arg0: i32) -> (i32, i32) {
    %c0_i32 = arith.constant 0 : i32
    %c0_i32_0 = arith.constant 0 : i32
    %c0_i32_1 = arith.constant 0 : i32
    return %c0_i32, %c0_i32_0 : i32, i32
  }
  func.func @transform_3(%arg0: i32) -> (i32, i32) {
    %c0_i32 = arith.constant 0 : i32
    %c0_i32_0 = arith.constant 0 : i32
    %c0_i32_1 = arith.constant 0 : i32
    return %c0_i32, %c0_i32_0 : i32, i32
  }
  func.func @transform_4(%arg0: i32) -> (i32, i32) {
    %c0_i32 = arith.constant 0 : i32
    %c0_i32_0 = arith.constant 0 : i32
    %c0_i32_1 = arith.constant 0 : i32
    return %c0_i32, %c0_i32_0 : i32, i32
  }
  func.func @transform_5(%arg0: i32) -> (i32, i32) {
    %c0_i32 = arith.constant 0 : i32
    %c0_i32_0 = arith.constant 0 : i32
    %c0_i32_1 = arith.constant 0 : i32
    return %c0_i32, %c0_i32_0 : i32, i32
  }
  func.func @transform_6(%arg0: i32) -> (i32, i32) {
    %c0_i32 = arith.constant 0 : i32
    %c0_i32_0 = arith.constant 0 : i32
    %c0_i32_1 = arith.constant 0 : i32
    return %c0_i32, %c0_i32_0 : i32, i32
  }
  func.func @transform_7(%arg0: i32) -> (i32, i32) {
    %c0_i32 = arith.constant 0 : i32
    %c0_i32_0 = arith.constant 0 : i32
    return %arg0, %c0_i32 : i32, i32
  }
}

</mosaic_0001>

<llo_original>
// kernel: discriminator_forward.1
$region0: #{discriminator_forward.1}
  #allocation0 [shape = 'u32[]', space=smem, size = 0x4, offset = 0x4, fixed_abs, tag = 'smem constant byte address 0x4 - core index']
  #allocation1 [shape = 'u32[72,128]{1,0:T(1,128)}', space=vmem, size = 0x9000, scoped, tag = 'internal scratch']
  %s0 = inlined_call_operand.vmem [shape: bf16[16,32], index: 0, kind: input, shape index: {}]
  %s1 = inlined_call_operand.vmem [shape: bf16[32,768], index: 1, kind: input, shape index: {}]
  %s2 = inlined_call_operand.vmem [shape: f32[1,768], index: 2, kind: input, shape index: {}]
  %s3 = inlined_call_operand.vmem [shape: bf16[768,768], index: 3, kind: input, shape index: {}]
  %s4 = inlined_call_operand.vmem [shape: f32[1,768], index: 4, kind: input, shape index: {}]
  %s5 = inlined_call_operand.vmem [shape: bf16[768,128], index: 5, kind: input, shape index: {}]
  %s6 = inlined_call_operand.vmem [shape: f32[1,128], index: 6, kind: input, shape index: {}]
  %s7 = inlined_call_operand.hbm [shape: f32[16,128], index: 7, kind: output, shape index: {}]
  %s8 = sld [smem:[#allocation0]]
  $region38: #{discriminator_forward.1} parent=0
    _
  %s10 = ssub.s32 1, %s8
  %s11 = scalar_select 0, %s10, %s8
  $region1: #{discriminator_forward.1} parent=0
    #allocation2 [shape = 'u8[8192]{0}', space=vmem, size = 0x2000, scoped, tag = 'output window, operand 0, single buffered']
    #allocation3 [shape = 's32[1]{0}', space=sflag, size = 0x4, scoped, tag = 'scoped memory for discriminator_forward.1']
    %12 = vsyncpa [#allocation3], 0
    // Predicated region
    $region2: #{discriminator_forward.1} parent=1 // pred_check
      _
    $region3: #{discriminator_forward.1} parent=1 // pred_check_branch
      %14 = sbr.rel (0) target = $region5
    $region4: #{discriminator_forward.1} parent=1 // pred_region
      _
    $region5: #{discriminator_forward.1} parent=1 // pred_fallthru
      _
    // Predicated region
    $region6: #{discriminator_forward.1} parent=1 // pred_check
      _
    $region7: #{discriminator_forward.1} parent=1 // pred_check_branch
      %16 = sbr.rel (0) target = $region9
    $region8: #{discriminator_forward.1} parent=1 // pred_region
      _
    $region9: #{discriminator_forward.1} parent=1 // pred_fallthru
      _
    // Predicated region
    $region10: #{discriminator_forward.1} parent=1 // pred_check
      _
    $region11: #{discriminator_forward.1} parent=1 // pred_check_branch
      %18 = sbr.rel (0) target = $region13
    $region12: #{discriminator_forward.1} parent=1 // pred_region
      _
    $region13: #{discriminator_forward.1} parent=1 // pred_fallthru
      _
    // Predicated region
    $region14: #{discriminator_forward.1} parent=1 // pred_check
      _
    $region15: #{discriminator_forward.1} parent=1 // pred_check_branch
      %20 = sbr.rel (0) target = $region17
    $region16: #{discriminator_forward.1} parent=1 // pred_region
      _
    $region17: #{discriminator_forward.1} parent=1 // pred_fallthru
      _
    // Predicated region
    $region18: #{discriminator_forward.1} parent=1 // pred_check
      _
    $region19: #{discriminator_forward.1} parent=1 // pred_check_branch
      %22 = sbr.rel (0) target = $region21
    $region20: #{discriminator_forward.1} parent=1 // pred_region
      _
    $region21: #{discriminator_forward.1} parent=1 // pred_fallthru
      _
    // Predicated region
    $region22: #{discriminator_forward.1} parent=1 // pred_check
      _
    $region23: #{discriminator_forward.1} parent=1 // pred_check_branch
      %24 = sbr.rel (0) target = $region25
    $region24: #{discriminator_forward.1} parent=1 // pred_region
      _
    $region25: #{discriminator_forward.1} parent=1 // pred_fallthru
      _
    // Predicated region
    $region26: #{discriminator_forward.1} parent=1 // pred_check
      _
    $region27: #{discriminator_forward.1} parent=1 // pred_check_branch
      %26 = sbr.rel (0) target = $region29
    $region28: #{discriminator_forward.1} parent=1 // pred_region
      _
    $region29: #{discriminator_forward.1} parent=1 // pred_fallthru
      _
    %v28 = vld [vmem:[%s0] sm:$0xf]
    %v29 = vld [vmem:[%s0 + $0x4] sm:$0xf]
    %v30 = vld [vmem:[%s1] sm:$0xff]
    %v31 = vld [vmem:[%s1 + $0x8] sm:$0xff]
    %v32 = vld [vmem:[%s1 + $0x10] sm:$0xff]
    %v33 = vld [vmem:[%s1 + $0x18] sm:$0xff]
    %v34 = vld [vmem:[%s1 + $0x20] sm:$0xff]
    %v35 = vld [vmem:[%s1 + $0x28] sm:$0xff]
    %v36 = vld [vmem:[%s1 + $0x30] sm:$0xff]
    %v37 = vld [vmem:[%s1 + $0x38] sm:$0xff]
    %v38 = vld [vmem:[%s1 + $0x40] sm:$0xff]
    %v39 = vld [vmem:[%s1 + $0x48] sm:$0xff]
    %v40 = vld [vmem:[%s1 + $0x50] sm:$0xff]
    %v41 = vld [vmem:[%s1 + $0x58] sm:$0xff]
    %v42 = vld [vmem:[%s2] sm:$0x3f]
    %v44 = vperm.slane %v42, 0
    %v45 = vperm.slane %v42, 1
    %v46 = vperm.slane %v42, 2
    %v47 = vperm.slane %v42, 3
    %v48 = vperm.slane %v42, 4
    %v49 = vperm.slane %v42, 5
    %v58 = vunpack.c.l.b16 %v28
    %v59 = vunpack.c.l.b16 %v29
    %v60 = vpack.c.b16 %v59, %v58
    %v73 = vunpack.c.l.b16 %v30
    %v74 = vunpack.c.h.b16 %v30
    %v75 = vunpack.c.l.b16 %v31
    %v76 = vunpack.c.h.b16 %v31
    %v77 = vunpack.c.l.b16 %v32
    %v78 = vunpack.c.h.b16 %v32
    %v79 = vunpack.c.l.b16 %v33
    %v80 = vunpack.c.h.b16 %v33
    %v81 = vunpack.c.l.b16 %v34
    %v82 = vunpack.c.h.b16 %v34
    %v83 = vunpack.c.l.b16 %v35
    %v84 = vunpack.c.h.b16 %v35
    %v85 = vunpack.c.l.b16 %v36
    %v86 = vunpack.c.h.b16 %v36
    %v87 = vunpack.c.l.b16 %v37
    %v88 = vunpack.c.h.b16 %v37
    %v89 = vunpack.c.l.b16 %v38
    %v90 = vunpack.c.h.b16 %v38
    %v91 = vunpack.c.l.b16 %v39
    %v92 = vunpack.c.h.b16 %v39
    %v93 = vunpack.c.l.b16 %v40
    %v94 = vunpack.c.h.b16 %v40
    %v95 = vunpack.c.l.b16 %v41
    %v96 = vunpack.c.h.b16 %v41
    %v97 = vpack.c.b16 %v79, %v73
    %v98 = vpack.c.b16 %v80, %v74
    %v99 = vpack.c.b16 %v81, %v75
    %v100 = vpack.c.b16 %v82, %v76
    %v101 = vpack.c.b16 %v83, %v77
    %v102 = vpack.c.b16 %v84, %v78
    %v103 = vpack.c.b16 %v91, %v85
    %v104 = vpack.c.b16 %v92, %v86
    %v105 = vpack.c.b16 %v93, %v87
    %v106 = vpack.c.b16 %v94, %v88
    %v107 = vpack.c.b16 %v95, %v89
    %v108 = vpack.c.b16 %v96, %v90
    %vm121 = vcmask 261120
    %v123 = vsel %vm121, %v60, 0
    %125 = vmatpush.bf16.msra.mxu0 0
    %126 = vmatpush.bf16.msra.mxu0 0
    %127 = vmatpush.bf16.msra.mxu0 0
    %128 = vmatpush.bf16.msra.mxu0 0
    %129 = vmatpush.bf16.msra.mxu0 0
    %130 = vmatpush.bf16.msra.mxu0 0
    %131 = vmatpush.bf16.msra.mxu0 %v103
    %132 = vmatpush.bf16.msra.mxu0 %v97
    %133 = vmatmul.bf16.gmra.mxu0 %v123
    %v134 = vpop.f32.mrf.mxu0
    %v135 = vadd.f32 %v44, %v134
    %v136 = vpop.f32.mrf.mxu0
    %v137 = vadd.f32 %v44, %v136
    %138 = vdwg.mxu0
    %139 = vmatpush.bf16.msra.mxu0 0
    %140 = vmatpush.bf16.msra.mxu0 0
    %141 = vmatpush.bf16.msra.mxu0 0
    %142 = vmatpush.bf16.msra.mxu0 0
    %143 = vmatpush.bf16.msra.mxu0 0
    %144 = vmatpush.bf16.msra.mxu0 0
    %145 = vmatpush.bf16.msra.mxu0 %v104
    %146 = vmatpush.bf16.msra.mxu0 %v98
    %147 = vmatmul.bf16.gmra.mxu0 %v123
    %v148 = vpop.f32.mrf.mxu0
    %v149 = vadd.f32 %v45, %v148
    %v150 = vpop.f32.mrf.mxu0
    %v151 = vadd.f32 %v45, %v150
    %152 = vdwg.mxu0
    %153 = vmatpush.bf16.msra.mxu0 0
    %154 = vmatpush.bf16.msra.mxu0 0
    %155 = vmatpush.bf16.msra.mxu0 0
    %156 = vmatpush.bf16.msra.mxu0 0
    %157 = vmatpush.bf16.msra.mxu0 0
    %158 = vmatpush.bf16.msra.mxu0 0
    %159 = vmatpush.bf16.msra.mxu0 %v105
    %160 = vmatpush.bf16.msra.mxu0 %v99
    %161 = vmatmul.bf16.gmra.mxu0 %v123
    %v162 = vpop.f32.mrf.mxu0
    %v163 = vadd.f32 %v46, %v162
    %v164 = vpop.f32.mrf.mxu0
    %v165 = vadd.f32 %v46, %v164
    %166 = vdwg.mxu0
    %167 = vmatpush.bf16.msra.mxu0 0
    %168 = vmatpush.bf16.msra.mxu0 0
    %169 = vmatpush.bf16.msra.mxu0 0
    %170 = vmatpush.bf16.msra.mxu0 0
    %171 = vmatpush.bf16.msra.mxu0 0
    %172 = vmatpush.bf16.msra.mxu0 0
    %173 = vmatpush.bf16.msra.mxu0 %v106
    %174 = vmatpush.bf16.msra.mxu0 %v100
    %175 = vmatmul.bf16.gmra.mxu0 %v123
    %v176 = vpop.f32.mrf.mxu0
    %v177 = vadd.f32 %v47, %v176
    %v178 = vpop.f32.mrf.mxu0
    %v179 = vadd.f32 %v47, %v178
    %180 = vdwg.mxu0
    %181 = vmatpush.bf16.msra.mxu0 0
    %182 = vmatpush.bf16.msra.mxu0 0
    %183 = vmatpush.bf16.msra.mxu0 0
    %184 = vmatpush.bf16.msra.mxu0 0
    %185 = vmatpush.bf16.msra.mxu0 0
    %186 = vmatpush.bf16.msra.mxu0 0
    %187 = vmatpush.bf16.msra.mxu0 %v107
    %188 = vmatpush.bf16.msra.mxu0 %v101
    %189 = vmatmul.bf16.gmra.mxu0 %v123
    %v190 = vpop.f32.mrf.mxu0
    %v191 = vadd.f32 %v48, %v190
    %v192 = vpop.f32.mrf.mxu0
    %v193 = vadd.f32 %v48, %v192
    %194 = vdwg.mxu0
    %195 = vmatpush.bf16.msra.mxu0 0
    %196 = vmatpush.bf16.msra.mxu0 0
    %197 = vmatpush.bf16.msra.mxu0 0
    %198 = vmatpush.bf16.msra.mxu0 0
    %199 = vmatpush.bf16.msra.mxu0 0
    %200 = vmatpush.bf16.msra.mxu0 0
    %201 = vmatpush.bf16.msra.mxu0 %v108
    %202 = vmatpush.bf16.msra.mxu0 %v102
    %203 = vmatmul.bf16.gmra.mxu0 %v123
    %v204 = vpop.f32.mrf.mxu0
    %v205 = vadd.f32 %v49, %v204
    %v206 = vpop.f32.mrf.mxu0
    %v207 = vadd.f32 %v49, %v206
    %208 = vdwg.mxu0
    %v209 = vpack.c.bf16 %v149, %v135
    %v210 = vpack.c.bf16 %v177, %v163
    %v211 = vpack.c.bf16 %v205, %v191
    %v212 = vpack.c.bf16 %v151, %v137
    %v213 = vpack.c.bf16 %v179, %v165
    %v214 = vpack.c.bf16 %v207, %v193
    %v215 = vunpack.c.l.bf16 %v209
    %v216 = vunpack.c.h.bf16 %v209
    %v217 = vunpack.c.l.bf16 %v210
    %v218 = vunpack.c.h.bf16 %v210
    %v219 = vunpack.c.l.bf16 %v211
    %v220 = vunpack.c.h.bf16 %v211
    %v221 = vunpack.c.l.bf16 %v212
    %v222 = vunpack.c.h.bf16 %v212
    %v223 = vunpack.c.l.bf16 %v213
    %v224 = vunpack.c.h.bf16 %v213
    %v225 = vunpack.c.l.bf16 %v214
    %v226 = vunpack.c.h.bf16 %v214
    %v227 = vmul.f32 %v215, 0.010009766
    %v228 = vmul.f32 %v216, 0.010009766
    %v229 = vmul.f32 %v217, 0.010009766
    %v230 = vmul.f32 %v218, 0.010009766
    %v231 = vmul.f32 %v219, 0.010009766
    %v232 = vmul.f32 %v220, 0.010009766
    %v233 = vmul.f32 %v221, 0.010009766
    %v234 = vmul.f32 %v222, 0.010009766
    %v235 = vmul.f32 %v223, 0.010009766
    %v236 = vmul.f32 %v224, 0.010009766
    %v237 = vmul.f32 %v225, 0.010009766
    %v238 = vmul.f32 %v226, 0.010009766
    %v239 = vpack.c.bf16 %v228, %v227
    %v240 = vpack.c.bf16 %v230, %v229
    %v241 = vpack.c.bf16 %v232, %v231
    %v242 = vpack.c.bf16 %v234, %v233
    %v243 = vpack.c.bf16 %v236, %v235
    %v244 = vpack.c.bf16 %v238, %v237
    %v245 = vunpack.c.l.bf16 %v239
    %v246 = vunpack.c.h.bf16 %v239
    %v247 = vunpack.c.l.bf16 %v240
    %v248 = vunpack.c.h.bf16 %v240
    %v249 = vunpack.c.l.bf16 %v241
    %v250 = vunpack.c.h.bf16 %v241
    %v251 = vunpack.c.l.bf16 %v242
    %v252 = vunpack.c.h.bf16 %v242
    %v253 = vunpack.c.l.bf16 %v243
    %v254 = vunpack.c.h.bf16 %v243
    %v255 = vunpack.c.l.bf16 %v244
    %v256 = vunpack.c.h.bf16 %v244
    %v257 = vmax.f32 %v215, %v245
    %v258 = vmax.f32 %v216, %v246
    %v259 = vmax.f32 %v217, %v247
    %v260 = vmax.f32 %v218, %v248
    %v261 = vmax.f32 %v219, %v249
    %v262 = vmax.f32 %v220, %v250
    %v263 = vmax.f32 %v221, %v251
    %v264 = vmax.f32 %v222, %v252
    %v265 = vmax.f32 %v223, %v253
    %v266 = vmax.f32 %v224, %v254
    %v267 = vmax.f32 %v225, %v255
    %v268 = vmax.f32 %v226, %v256
    %v269 = vpack.c.bf16 %v263, %v257
    %v270 = vpack.c.bf16 %v264, %v258
    %v271 = vpack.c.bf16 %v265, %v259
    %v272 = vpack.c.bf16 %v266, %v260
    %v273 = vpack.c.bf16 %v267, %v261
    %v274 = vpack.c.bf16 %v268, %v262
    %v275 = vld [vmem:[%s3] sm:$0xff]
    %v276 = vld [vmem:[%s3 + $0x8] sm:$0xff]
    %v277 = vld [vmem:[%s3 + $0x10] sm:$0xff]
    %v278 = vld [vmem:[%s3 + $0x18] sm:$0xff]
    %v279 = vld [vmem:[%s3 + $0x20] sm:$0xff]
    %v280 = vld [vmem:[%s3 + $0x28] sm:$0xff]
    %v281 = vld [vmem:[%s3 + $0x30] sm:$0xff]
    %v282 = vld [vmem:[%s3 + $0x38] sm:$0xff]
    %v283 = vld [vmem:[%s3 + $0x40] sm:$0xff]
    %v284 = vld [vmem:[%s3 + $0x48] sm:$0xff]
    %v285 = vld [vmem:[%s3 + $0x50] sm:$0xff]
    %v286 = vld [vmem:[%s3 + $0x58] sm:$0xff]
    %v287 = vld [vmem:[%s3 + $0x60] sm:$0xff]
    %v288 = vld [vmem:[%s3 + $0x68] sm:$0xff]
    %v289 = vld [vmem:[%s3 + $0x70] sm:$0xff]
    %v290 = vld [vmem:[%s3 + $0x78] sm:$0xff]
    %v291 = vld [vmem:[%s3 + $0x80] sm:$0xff]
    %v292 = vld [vmem:[%s3 + $0x88] sm:$0xff]
    %v293 = vld [vmem:[%s3 + $0x90] sm:$0xff]
    %v294 = vld [vmem:[%s3 + $0x98] sm:$0xff]
    %v295 = vld [vmem:[%s3 + $0xa0] sm:$0xff]
    %v296 = vld [vmem:[%s3 + $0xa8] sm:$0xff]
    %v297 = vld [vmem:[%s3 + $0xb0] sm:$0xff]
    %v298 = vld [vmem:[%s3 + $0xb8] sm:$0xff]
    %v299 = vld [vmem:[%s3 + $0xc0] sm:$0xff]
    %v300 = vld [vmem:[%s3 + $0xc8] sm:$0xff]
    %v301 = vld [vmem:[%s3 + $0xd0] sm:$0xff]
    %v302 = vld [vmem:[%s3 + $0xd8] sm:$0xff]
    %v303 = vld [vmem:[%s3 + $0xe0] sm:$0xff]
    %v304 = vld [vmem:[%s3 + $0xe8] sm:$0xff]
    %v305 = vld [vmem:[%s3 + $0xf0] sm:$0xff]
    %v306 = vld [vmem:[%s3 + $0xf8] sm:$0xff]
    %v307 = vld [vmem:[%s3 + $0x100] sm:$0xff]
    %v308 = vld [vmem:[%s3 + $0x108] sm:$0xff]
    %v309 = vld [vmem:[%s3 + $0x110] sm:$0xff]
    %v310 = vld [vmem:[%s3 + $0x118] sm:$0xff]
    %v311 = vld [vmem:[%s3 + $0x120] sm:$0xff]
    %v312 = vld [vmem:[%s3 + $0x128] sm:$0xff]
    %v313 = vld [vmem:[%s3 + $0x130] sm:$0xff]
    %v314 = vld [vmem:[%s3 + $0x138] sm:$0xff]
    %v315 = vld [vmem:[%s3 + $0x140] sm:$0xff]
    %v316 = vld [vmem:[%s3 + $0x148] sm:$0xff]
    %v317 = vld [vmem:[%s3 + $0x150] sm:$0xff]
    %v318 = vld [vmem:[%s3 + $0x158] sm:$0xff]
    %v319 = vld [vmem:[%s3 + $0x160] sm:$0xff]
    %v320 = vld [vmem:[%s3 + $0x168] sm:$0xff]
    %v321 = vld [vmem:[%s3 + $0x170] sm:$0xff]
    %v322 = vld [vmem:[%s3 + $0x178] sm:$0xff]
    %v323 = vld [vmem:[%s3 + $0x180] sm:$0xff]
    %v324 = vld [vmem:[%s3 + $0x188] sm:$0xff]
    %v325 = vld [vmem:[%s3 + $0x190] sm:$0xff]
    %v326 = vld [vmem:[%s3 + $0x198] sm:$0xff]
    %v327 = vld [vmem:[%s3 + $0x1a0] sm:$0xff]
    %v328 = vld [vmem:[%s3 + $0x1a8] sm:$0xff]
    %v329 = vld [vmem:[%s3 + $0x1b0] sm:$0xff]
    %v330 = vld [vmem:[%s3 + $0x1b8] sm:$0xff]
    %v331 = vld [vmem:[%s3 + $0x1c0] sm:$0xff]
    %v332 = vld [vmem:[%s3 + $0x1c8] sm:$0xff]
    %v333 = vld [vmem:[%s3 + $0x1d0] sm:$0xff]
    %v334 = vld [vmem:[%s3 + $0x1d8] sm:$0xff]
    %v335 = vld [vmem:[%s3 + $0x1e0] sm:$0xff]
    %v336 = vld [vmem:[%s3 + $0x1e8] sm:$0xff]
    %v337 = vld [vmem:[%s3 + $0x1f0] sm:$0xff]
    %v338 = vld [vmem:[%s3 + $0x1f8] sm:$0xff]
    %v339 = vld [vmem:[%s3 + $0x200] sm:$0xff]
    %v340 = vld [vmem:[%s3 + $0x208] sm:$0xff]
    %v341 = vld [vmem:[%s3 + $0x210] sm:$0xff]
    %v342 = vld [vmem:[%s3 + $0x218] sm:$0xff]
    %v343 = vld [vmem:[%s3 + $0x220] sm:$0xff]
    %v344 = vld [vmem:[%s3 + $0x228] sm:$0xff]
    %v345 = vld [vmem:[%s3 + $0x230] sm:$0xff]
    %v346 = vld [vmem:[%s3 + $0x238] sm:$0xff]
    %v347 = vld [vmem:[%s3 + $0x240] sm:$0xff]
    %v348 = vld [vmem:[%s3 + $0x248] sm:$0xff]
    %v349 = vld [vmem:[%s3 + $0x250] sm:$0xff]
    %v350 = vld [vmem:[%s3 + $0x258] sm:$0xff]
    %v351 = vld [vmem:[%s3 + $0x260] sm:$0xff]
    %v352 = vld [vmem:[%s3 + $0x268] sm:$0xff]
    %v353 = vld [vmem:[%s3 + $0x270] sm:$0xff]
    %v354 = vld [vmem:[%s3 + $0x278] sm:$0xff]
    %v355 = vld [vmem:[%s3 + $0x280] sm:$0xff]
    %v356 = vld [vmem:[%s3 + $0x288] sm:$0xff]
    %v357 = vld [vmem:[%s3 + $0x290] sm:$0xff]
    %v358 = vld [vmem:[%s3 + $0x298] sm:$0xff]
    %v359 = vld [vmem:[%s3 + $0x2a0] sm:$0xff]
    %v360 = vld [vmem:[%s3 + $0x2a8] sm:$0xff]
    %v361 = vld [vmem:[%s3 + $0x2b0] sm:$0xff]
    %v362 = vld [vmem:[%s3 + $0x2b8] sm:$0xff]
    %v363 = vld [vmem:[%s3 + $0x2c0] sm:$0xff]
    %v364 = vld [vmem:[%s3 + $0x2c8] sm:$0xff]
    %v365 = vld [vmem:[%s3 + $0x2d0] sm:$0xff]
    %v366 = vld [vmem:[%s3 + $0x2d8] sm:$0xff]
    %v367 = vld [vmem:[%s3 + $0x2e0] sm:$0xff]
    %v368 = vld [vmem:[%s3 + $0x2e8] sm:$0xff]
    %v369 = vld [vmem:[%s3 + $0x2f0] sm:$0xff]
    %v370 = vld [vmem:[%s3 + $0x2f8] sm:$0xff]
    %v371 = vld [vmem:[%s3 + $0x300] sm:$0xff]
    %v372 = vld [vmem:[%s3 + $0x308] sm:$0xff]
    %v373 = vld [vmem:[%s3 + $0x310] sm:$0xff]
    %v374 = vld [vmem:[%s3 + $0x318] sm:$0xff]
    %v375 = vld [vmem:[%s3 + $0x320] sm:$0xff]
    %v376 = vld [vmem:[%s3 + $0x328] sm:$0xff]
    %v377 = vld [vmem:[%s3 + $0x330] sm:$0xff]
    %v378 = vld [vmem:[%s3 + $0x338] sm:$0xff]
    %v379 = vld [vmem:[%s3 + $0x340] sm:$0xff]
    %v380 = vld [vmem:[%s3 + $0x348] sm:$0xff]
    %v381 = vld [vmem:[%s3 + $0x350] sm:$0xff]
    %v382 = vld [vmem:[%s3 + $0x358] sm:$0xff]
    %v383 = vld [vmem:[%s3 + $0x360] sm:$0xff]
    %v384 = vld [vmem:[%s3 + $0x368] sm:$0xff]
    %v385 = vld [vmem:[%s3 + $0x370] sm:$0xff]
    %v386 = vld [vmem:[%s3 + $0x378] sm:$0xff]
    %v387 = vld [vmem:[%s3 + $0x380] sm:$0xff]
    %v388 = vld [vmem:[%s3 + $0x388] sm:$0xff]
    %v389 = vld [vmem:[%s3 + $0x390] sm:$0xff]
    %v390 = vld [vmem:[%s3 + $0x398] sm:$0xff]
    %v391 = vld [vmem:[%s3 + $0x3a0] sm:$0xff]
    %v392 = vld [vmem:[%s3 + $0x3a8] sm:$0xff]
    %v393 = vld [vmem:[%s3 + $0x3b0] sm:$0xff]
    %v394 = vld [vmem:[%s3 + $0x3b8] sm:$0xff]
    %v395 = vld [vmem:[%s3 + $0x3c0] sm:$0xff]
    %v396 = vld [vmem:[%s3 + $0x3c8] sm:$0xff]
    %v397 = vld [vmem:[%s3 + $0x3d0] sm:$0xff]
    %v398 = vld [vmem:[%s3 + $0x3d8] sm:$0xff]
    %v399 = vld [vmem:[%s3 + $0x3e0] sm:$0xff]
    %v400 = vld [vmem:[%s3 + $0x3e8] sm:$0xff]
    %v401 = vld [vmem:[%s3 + $0x3f0] sm:$0xff]
    %v402 = vld [vmem:[%s3 + $0x3f8] sm:$0xff]
    %v403 = vld [vmem:[%s3 + $0x400] sm:$0xff]
    %v404 = vld [vmem:[%s3 + $0x408] sm:$0xff]
    %v405 = vld [vmem:[%s3 + $0x410] sm:$0xff]
    %v406 = vld [vmem:[%s3 + $0x418] sm:$0xff]
    %v407 = vld [vmem:[%s3 + $0x420] sm:$0xff]
    %v408 = vld [vmem:[%s3 + $0x428] sm:$0xff]
    %v409 = vld [vmem:[%s3 + $0x430] sm:$0xff]
    %v410 = vld [vmem:[%s3 + $0x438] sm:$0xff]
    %v411 = vld [vmem:[%s3 + $0x440] sm:$0xff]
    %v412 = vld [vmem:[%s3 + $0x448] sm:$0xff]
    %v413 = vld [vmem:[%s3 + $0x450] sm:$0xff]
    %v414 = vld [vmem:[%s3 + $0x458] sm:$0xff]
    %v415 = vld [vmem:[%s3 + $0x460] sm:$0xff]
    %v416 = vld [vmem:[%s3 + $0x468] sm:$0xff]
    %v417 = vld [vmem:[%s3 + $0x470] sm:$0xff]
    %v418 = vld [vmem:[%s3 + $0x478] sm:$0xff]
    %v419 = vld [vmem:[%s3 + $0x480] sm:$0xff]
    %v420 = vld [vmem:[%s3 + $0x488] sm:$0xff]
    %v421 = vld [vmem:[%s3 + $0x490] sm:$0xff]
    %v422 = vld [vmem:[%s3 + $0x498] sm:$0xff]
    %v423 = vld [vmem:[%s3 + $0x4a0] sm:$0xff]
    %v424 = vld [vmem:[%s3 + $0x4a8] sm:$0xff]
    %v425 = vld [vmem:[%s3 + $0x4b0] sm:$0xff]
    %v426 = vld [vmem:[%s3 + $0x4b8] sm:$0xff]
    %v427 = vld [vmem:[%s3 + $0x4c0] sm:$0xff]
    %v428 = vld [vmem:[%s3 + $0x4c8] sm:$0xff]
    %v429 = vld [vmem:[%s3 + $0x4d0] sm:$0xff]
    %v430 = vld [vmem:[%s3 + $0x4d8] sm:$0xff]
    %v431 = vld [vmem:[%s3 + $0x4e0] sm:$0xff]
    %v432 = vld [vmem:[%s3 + $0x4e8] sm:$0xff]
    %v433 = vld [vmem:[%s3 + $0x4f0] sm:$0xff]
    %v434 = vld [vmem:[%s3 + $0x4f8] sm:$0xff]
    %v435 = vld [vmem:[%s3 + $0x500] sm:$0xff]
    %v436 = vld [vmem:[%s3 + $0x508] sm:$0xff]
    %v437 = vld [vmem:[%s3 + $0x510] sm:$0xff]
    %v438 = vld [vmem:[%s3 + $0x518] sm:$0xff]
    %v439 = vld [vmem:[%s3 + $0x520] sm:$0xff]
    %v440 = vld [vmem:[%s3 + $0x528] sm:$0xff]
    %v441 = vld [vmem:[%s3 + $0x530] sm:$0xff]
    %v442 = vld [vmem:[%s3 + $0x538] sm:$0xff]
    %v443 = vld [vmem:[%s3 + $0x540] sm:$0xff]
    %v444 = vld [vmem:[%s3 + $0x548] sm:$0xff]
    %v445 = vld [vmem:[%s3 + $0x550] sm:$0xff]
    %v446 = vld [vmem:[%s3 + $0x558] sm:$0xff]
    %v447 = vld [vmem:[%s3 + $0x560] sm:$0xff]
    %v448 = vld [vmem:[%s3 + $0x568] sm:$0xff]
    %v449 = vld [vmem:[%s3 + $0x570] sm:$0xff]
    %v450 = vld [vmem:[%s3 + $0x578] sm:$0xff]
    %v451 = vld [vmem:[%s3 + $0x580] sm:$0xff]
    %v452 = vld [vmem:[%s3 + $0x588] sm:$0xff]
    %v453 = vld [vmem:[%s3 + $0x590] sm:$0xff]
    %v454 = vld [vmem:[%s3 + $0x598] sm:$0xff]
    %v455 = vld [vmem:[%s3 + $0x5a0] sm:$0xff]
    %v456 = vld [vmem:[%s3 + $0x5a8] sm:$0xff]
    %v457 = vld [vmem:[%s3 + $0x5b0] sm:$0xff]
    %v458 = vld [vmem:[%s3 + $0x5b8] sm:$0xff]
    %v459 = vld [vmem:[%s3 + $0x5c0] sm:$0xff]
    %v460 = vld [vmem:[%s3 + $0x5c8] sm:$0xff]
    %v461 = vld [vmem:[%s3 + $0x5d0] sm:$0xff]
    %v462 = vld [vmem:[%s3 + $0x5d8] sm:$0xff]
    %v463 = vld [vmem:[%s3 + $0x5e0] sm:$0xff]
    %v464 = vld [vmem:[%s3 + $0x5e8] sm:$0xff]
    %v465 = vld [vmem:[%s3 + $0x5f0] sm:$0xff]
    %v466 = vld [vmem:[%s3 + $0x5f8] sm:$0xff]
    %v467 = vld [vmem:[%s3 + $0x600] sm:$0xff]
    %v468 = vld [vmem:[%s3 + $0x608] sm:$0xff]
    %v469 = vld [vmem:[%s3 + $0x610] sm:$0xff]
    %v470 = vld [vmem:[%s3 + $0x618] sm:$0xff]
    %v471 = vld [vmem:[%s3 + $0x620] sm:$0xff]
    %v472 = vld [vmem:[%s3 + $0x628] sm:$0xff]
    %v473 = vld [vmem:[%s3 + $0x630] sm:$0xff]
    %v474 = vld [vmem:[%s3 + $0x638] sm:$0xff]
    %v475 = vld [vmem:[%s3 + $0x640] sm:$0xff]
    %v476 = vld [vmem:[%s3 + $0x648] sm:$0xff]
    %v477 = vld [vmem:[%s3 + $0x650] sm:$0xff]
    %v478 = vld [vmem:[%s3 + $0x658] sm:$0xff]
    %v479 = vld [vmem:[%s3 + $0x660] sm:$0xff]
    %v480 = vld [vmem:[%s3 + $0x668] sm:$0xff]
    %v481 = vld [vmem:[%s3 + $0x670] sm:$0xff]
    %v482 = vld [vmem:[%s3 + $0x678] sm:$0xff]
    %v483 = vld [vmem:[%s3 + $0x680] sm:$0xff]
    %v484 = vld [vmem:[%s3 + $0x688] sm:$0xff]
    %v485 = vld [vmem:[%s3 + $0x690] sm:$0xff]
    %v486 = vld [vmem:[%s3 + $0x698] sm:$0xff]
    %v487 = vld [vmem:[%s3 + $0x6a0] sm:$0xff]
    %v488 = vld [vmem:[%s3 + $0x6a8] sm:$0xff]
    %v489 = vld [vmem:[%s3 + $0x6b0] sm:$0xff]
    %v490 = vld [vmem:[%s3 + $0x6b8] sm:$0xff]
    %v491 = vld [vmem:[%s3 + $0x6c0] sm:$0xff]
    %v492 = vld [vmem:[%s3 + $0x6c8] sm:$0xff]
    %v493 = vld [vmem:[%s3 + $0x6d0] sm:$0xff]
    %v494 = vld [vmem:[%s3 + $0x6d8] sm:$0xff]
    %v495 = vld [vmem:[%s3 + $0x6e0] sm:$0xff]
    %v496 = vld [vmem:[%s3 + $0x6e8] sm:$0xff]
    %v497 = vld [vmem:[%s3 + $0x6f0] sm:$0xff]
    %v498 = vld [vmem:[%s3 + $0x6f8] sm:$0xff]
    %v499 = vld [vmem:[%s3 + $0x700] sm:$0xff]
    %v500 = vld [vmem:[%s3 + $0x708] sm:$0xff]
    %v501 = vld [vmem:[%s3 + $0x710] sm:$0xff]
    %v502 = vld [vmem:[%s3 + $0x718] sm:$0xff]
    %v503 = vld [vmem:[%s3 + $0x720] sm:$0xff]
    %v504 = vld [vmem:[%s3 + $0x728] sm:$0xff]
    %v505 = vld [vmem:[%s3 + $0x730] sm:$0xff]
    %v506 = vld [vmem:[%s3 + $0x738] sm:$0xff]
    %v507 = vld [vmem:[%s3 + $0x740] sm:$0xff]
    %v508 = vld [vmem:[%s3 + $0x748] sm:$0xff]
    %v509 = vld [vmem:[%s3 + $0x750] sm:$0xff]
    %v510 = vld [vmem:[%s3 + $0x758] sm:$0xff]
    %v511 = vld [vmem:[%s3 + $0x760] sm:$0xff]
    %v512 = vld [vmem:[%s3 + $0x768] sm:$0xff]
    %v513 = vld [vmem:[%s3 + $0x770] sm:$0xff]
    %v514 = vld [vmem:[%s3 + $0x778] sm:$0xff]
    %v515 = vld [vmem:[%s3 + $0x780] sm:$0xff]
    %v516 = vld [vmem:[%s3 + $0x788] sm:$0xff]
    %v517 = vld [vmem:[%s3 + $0x790] sm:$0xff]
    %v518 = vld [vmem:[%s3 + $0x798] sm:$0xff]
    %v519 = vld [vmem:[%s3 + $0x7a0] sm:$0xff]
    %v520 = vld [vmem:[%s3 + $0x7a8] sm:$0xff]
    %v521 = vld [vmem:[%s3 + $0x7b0] sm:$0xff]
    %v522 = vld [vmem:[%s3 + $0x7b8] sm:$0xff]
    %v523 = vld [vmem:[%s3 + $0x7c0] sm:$0xff]
    %v524 = vld [vmem:[%s3 + $0x7c8] sm:$0xff]
    %v525 = vld [vmem:[%s3 + $0x7d0] sm:$0xff]
    %v526 = vld [vmem:[%s3 + $0x7d8] sm:$0xff]
    %v527 = vld [vmem:[%s3 + $0x7e0] sm:$0xff]
    %v528 = vld [vmem:[%s3 + $0x7e8] sm:$0xff]
    %v529 = vld [vmem:[%s3 + $0x7f0] sm:$0xff]
    %v530 = vld [vmem:[%s3 + $0x7f8] sm:$0xff]
    %v531 = vld [vmem:[%s3 + $0x800] sm:$0xff]
    %v532 = vld [vmem:[%s3 + $0x808] sm:$0xff]
    %v533 = vld [vmem:[%s3 + $0x810] sm:$0xff]
    %v534 = vld [vmem:[%s3 + $0x818] sm:$0xff]
    %v535 = vld [vmem:[%s3 + $0x820] sm:$0xff]
    %v536 = vld [vmem:[%s3 + $0x828] sm:$0xff]
    %v537 = vld [vmem:[%s3 + $0x830] sm:$0xff]
    %v538 = vld [vmem:[%s3 + $0x838] sm:$0xff]
    %v539 = vld [vmem:[%s3 + $0x840] sm:$0xff]
    %v540 = vld [vmem:[%s3 + $0x848] sm:$0xff]
    %v541 = vld [vmem:[%s3 + $0x850] sm:$0xff]
    %v542 = vld [vmem:[%s3 + $0x858] sm:$0xff]
    %v543 = vld [vmem:[%s3 + $0x860] sm:$0xff]
    %v544 = vld [vmem:[%s3 + $0x868] sm:$0xff]
    %v545 = vld [vmem:[%s3 + $0x870] sm:$0xff]
    %v546 = vld [vmem:[%s3 + $0x878] sm:$0xff]
    %v547 = vld [vmem:[%s3 + $0x880] sm:$0xff]
    %v548 = vld [vmem:[%s3 + $0x888] sm:$0xff]
    %v549 = vld [vmem:[%s3 + $0x890] sm:$0xff]
    %v550 = vld [vmem:[%s3 + $0x898] sm:$0xff]
    %v551 = vld [vmem:[%s3 + $0x8a0] sm:$0xff]
    %v552 = vld [vmem:[%s3 + $0x8a8] sm:$0xff]
    %v553 = vld [vmem:[%s3 + $0x8b0] sm:$0xff]
    %v554 = vld [vmem:[%s3 + $0x8b8] sm:$0xff]
    %v555 = vld [vmem:[%s3 + $0x8c0] sm:$0xff]
    %v556 = vld [vmem:[%s3 + $0x8c8] sm:$0xff]
    %v557 = vld [vmem:[%s3 + $0x8d0] sm:$0xff]
    %v558 = vld [vmem:[%s3 + $0x8d8] sm:$0xff]
    %v559 = vld [vmem:[%s3 + $0x8e0] sm:$0xff]
    %v560 = vld [vmem:[%s3 + $0x8e8] sm:$0xff]
    %v561 = vld [vmem:[%s3 + $0x8f0] sm:$0xff]
    %v562 = vld [vmem:[%s3 + $0x8f8] sm:$0xff]
    %v563 = vld [vmem:[%s4] sm:$0x3f]
    %v565 = vperm.slane %v563, 0
    %v566 = vperm.slane %v563, 1
    %v567 = vperm.slane %v563, 2
    %v568 = vperm.slane %v563, 3
    %v569 = vperm.slane %v563, 4
    %v570 = vperm.slane %v563, 5
    %v865 = vunpack.c.l.b16 %v275
    %v866 = vunpack.c.h.b16 %v275
    %v867 = vunpack.c.l.b16 %v276
    %v868 = vunpack.c.h.b16 %v276
    %v869 = vunpack.c.l.b16 %v277
    %v870 = vunpack.c.h.b16 %v277
    %v871 = vunpack.c.l.b16 %v278
    %v872 = vunpack.c.h.b16 %v278
    %v873 = vunpack.c.l.b16 %v279
    %v874 = vunpack.c.h.b16 %v279
    %v875 = vunpack.c.l.b16 %v280
    %v876 = vunpack.c.h.b16 %v280
    %v877 = vunpack.c.l.b16 %v281
    %v878 = vunpack.c.h.b16 %v281
    %v879 = vunpack.c.l.b16 %v282
    %v880 = vunpack.c.h.b16 %v282
    %v881 = vunpack.c.l.b16 %v283
    %v882 = vunpack.c.h.b16 %v283
    %v883 = vunpack.c.l.b16 %v284
    %v884 = vunpack.c.h.b16 %v284
    %v885 = vunpack.c.l.b16 %v285
    %v886 = vunpack.c.h.b16 %v285
    %v887 = vunpack.c.l.b16 %v286
    %v888 = vunpack.c.h.b16 %v286
    %v889 = vunpack.c.l.b16 %v287
    %v890 = vunpack.c.h.b16 %v287
    %v891 = vunpack.c.l.b16 %v288
    %v892 = vunpack.c.h.b16 %v288
    %v893 = vunpack.c.l.b16 %v289
    %v894 = vunpack.c.h.b16 %v289
    %v895 = vunpack.c.l.b16 %v290
    %v896 = vunpack.c.h.b16 %v290
    %v897 = vunpack.c.l.b16 %v291
    %v898 = vunpack.c.h.b16 %v291
    %v899 = vunpack.c.l.b16 %v292
    %v900 = vunpack.c.h.b16 %v292
    %v901 = vunpack.c.l.b16 %v293
    %v902 = vunpack.c.h.b16 %v293
    %v903 = vunpack.c.l.b16 %v294
    %v904 = vunpack.c.h.b16 %v294
    %v905 = vunpack.c.l.b16 %v295
    %v906 = vunpack.c.h.b16 %v295
    %v907 = vunpack.c.l.b16 %v296
    %v908 = vunpack.c.h.b16 %v296
    %v909 = vunpack.c.l.b16 %v297
    %v910 = vunpack.c.h.b16 %v297
    %v911 = vunpack.c.l.b16 %v298
    %v912 = vunpack.c.h.b16 %v298
    %v913 = vunpack.c.l.b16 %v299
    %v914 = vunpack.c.h.b16 %v299
    %v915 = vunpack.c.l.b16 %v300
    %v916 = vunpack.c.h.b16 %v300
    %v917 = vunpack.c.l.b16 %v301
    %v918 = vunpack.c.h.b16 %v301
    %v919 = vunpack.c.l.b16 %v302
    %v920 = vunpack.c.h.b16 %v302
    %v921 = vunpack.c.l.b16 %v303
    %v922 = vunpack.c.h.b16 %v303
    %v923 = vunpack.c.l.b16 %v304
    %v924 = vunpack.c.h.b16 %v304
    %v925 = vunpack.c.l.b16 %v305
    %v926 = vunpack.c.h.b16 %v305
    %v927 = vunpack.c.l.b16 %v306
    %v928 = vunpack.c.h.b16 %v306
    %v929 = vunpack.c.l.b16 %v307
    %v930 = vunpack.c.h.b16 %v307
    %v931 = vunpack.c.l.b16 %v308
    %v932 = vunpack.c.h.b16 %v308
    %v933 = vunpack.c.l.b16 %v309
    %v934 = vunpack.c.h.b16 %v309
    %v935 = vunpack.c.l.b16 %v310
    %v936 = vunpack.c.h.b16 %v310
    %v937 = vunpack.c.l.b16 %v311
    %v938 = vunpack.c.h.b16 %v311
    %v939 = vunpack.c.l.b16 %v312
    %v940 = vunpack.c.h.b16 %v312
    %v941 = vunpack.c.l.b16 %v313
    %v942 = vunpack.c.h.b16 %v313
    %v943 = vunpack.c.l.b16 %v314
    %v944 = vunpack.c.h.b16 %v314
    %v945 = vunpack.c.l.b16 %v315
    %v946 = vunpack.c.h.b16 %v315
    %v947 = vunpack.c.l.b16 %v316
    %v948 = vunpack.c.h.b16 %v316
    %v949 = vunpack.c.l.b16 %v317
    %v950 = vunpack.c.h.b16 %v317
    %v951 = vunpack.c.l.b16 %v318
    %v952 = vunpack.c.h.b16 %v318
    %v953 = vunpack.c.l.b16 %v319
    %v954 = vunpack.c.h.b16 %v319
    %v955 = vunpack.c.l.b16 %v320
    %v956 = vunpack.c.h.b16 %v320
    %v957 = vunpack.c.l.b16 %v321
    %v958 = vunpack.c.h.b16 %v321
    %v959 = vunpack.c.l.b16 %v322
    %v960 = vunpack.c.h.b16 %v322
    %v961 = vunpack.c.l.b16 %v323
    %v962 = vunpack.c.h.b16 %v323
    %v963 = vunpack.c.l.b16 %v324
    %v964 = vunpack.c.h.b16 %v324
    %v965 = vunpack.c.l.b16 %v325
    %v966 = vunpack.c.h.b16 %v325
    %v967 = vunpack.c.l.b16 %v326
    %v968 = vunpack.c.h.b16 %v326
    %v969 = vunpack.c.l.b16 %v327
    %v970 = vunpack.c.h.b16 %v327
    %v971 = vunpack.c.l.b16 %v328
    %v972 = vunpack.c.h.b16 %v328
    %v973 = vunpack.c.l.b16 %v329
    %v974 = vunpack.c.h.b16 %v329
    %v975 = vunpack.c.l.b16 %v330
    %v976 = vunpack.c.h.b16 %v330
    %v977 = vunpack.c.l.b16 %v331
    %v978 = vunpack.c.h.b16 %v331
    %v979 = vunpack.c.l.b16 %v332
    %v980 = vunpack.c.h.b16 %v332
    %v981 = vunpack.c.l.b16 %v333
    %v982 = vunpack.c.h.b16 %v333
    %v983 = vunpack.c.l.b16 %v334
    %v984 = vunpack.c.h.b16 %v334
    %v985 = vunpack.c.l.b16 %v335
    %v986 = vunpack.c.h.b16 %v335
    %v987 = vunpack.c.l.b16 %v336
    %v988 = vunpack.c.h.b16 %v336
    %v989 = vunpack.c.l.b16 %v337
    %v990 = vunpack.c.h.b16 %v337
    %v991 = vunpack.c.l.b16 %v338
    %v992 = vunpack.c.h.b16 %v338
    %v993 = vunpack.c.l.b16 %v339
    %v994 = vunpack.c.h.b16 %v339
    %v995 = vunpack.c.l.b16 %v340
    %v996 = vunpack.c.h.b16 %v340
    %v997 = vunpack.c.l.b16 %v341
    %v998 = vunpack.c.h.b16 %v341
    %v999 = vunpack.c.l.b16 %v342
    %v1000 = vunpack.c.h.b16 %v342
    %v1001 = vunpack.c.l.b16 %v343
    %v1002 = vunpack.c.h.b16 %v343
    %v1003 = vunpack.c.l.b16 %v344
    %v1004 = vunpack.c.h.b16 %v344
    %v1005 = vunpack.c.l.b16 %v345
    %v1006 = vunpack.c.h.b16 %v345
    %v1007 = vunpack.c.l.b16 %v346
    %v1008 = vunpack.c.h.b16 %v346
    %v1009 = vunpack.c.l.b16 %v347
    %v1010 = vunpack.c.h.b16 %v347
    %v1011 = vunpack.c.l.b16 %v348
    %v1012 = vunpack.c.h.b16 %v348
    %v1013 = vunpack.c.l.b16 %v349
    %v1014 = vunpack.c.h.b16 %v349
    %v1015 = vunpack.c.l.b16 %v350
    %v1016 = vunpack.c.h.b16 %v350
    %v1017 = vunpack.c.l.b16 %v351
    %v1018 = vunpack.c.h.b16 %v351
    %v1019 = vunpack.c.l.b16 %v352
    %v1020 = vunpack.c.h.b16 %v352
    %v1021 = vunpack.c.l.b16 %v353
    %v1022 = vunpack.c.h.b16 %v353
    %v1023 = vunpack.c.l.b16 %v354
    %v1024 = vunpack.c.h.b16 %v354
    %v1025 = vunpack.c.l.b16 %v355
    %v1026 = vunpack.c.h.b16 %v355
    %v1027 = vunpack.c.l.b16 %v356
    %v1028 = vunpack.c.h.b16 %v356
    %v1029 = vunpack.c.l.b16 %v357
    %v1030 = vunpack.c.h.b16 %v357
    %v1031 = vunpack.c.l.b16 %v358
    %v1032 = vunpack.c.h.b16 %v358
    %v1033 = vunpack.c.l.b16 %v359
    %v1034 = vunpack.c.h.b16 %v359
    %v1035 = vunpack.c.l.b16 %v360
    %v1036 = vunpack.c.h.b16 %v360
    %v1037 = vunpack.c.l.b16 %v361
    %v1038 = vunpack.c.h.b16 %v361
    %v1039 = vunpack.c.l.b16 %v362
    %v1040 = vunpack.c.h.b16 %v362
    %v1041 = vunpack.c.l.b16 %v363
    %v1042 = vunpack.c.h.b16 %v363
    %v1043 = vunpack.c.l.b16 %v364
    %v1044 = vunpack.c.h.b16 %v364
    %v1045 = vunpack.c.l.b16 %v365
    %v1046 = vunpack.c.h.b16 %v365
    %v1047 = vunpack.c.l.b16 %v366
    %v1048 = vunpack.c.h.b16 %v366
    %v1049 = vunpack.c.l.b16 %v367
    %v1050 = vunpack.c.h.b16 %v367
    %v1051 = vunpack.c.l.b16 %v368
    %v1052 = vunpack.c.h.b16 %v368
    %v1053 = vunpack.c.l.b16 %v369
    %v1054 = vunpack.c.h.b16 %v369
    %v1055 = vunpack.c.l.b16 %v370
    %v1056 = vunpack.c.h.b16 %v370
    %v1057 = vunpack.c.l.b16 %v371
    %v1058 = vunpack.c.h.b16 %v371
    %v1059 = vunpack.c.l.b16 %v372
    %v1060 = vunpack.c.h.b16 %v372
    %v1061 = vunpack.c.l.b16 %v373
    %v1062 = vunpack.c.h.b16 %v373
    %v1063 = vunpack.c.l.b16 %v374
    %v1064 = vunpack.c.h.b16 %v374
    %v1065 = vunpack.c.l.b16 %v375
    %v1066 = vunpack.c.h.b16 %v375
    %v1067 = vunpack.c.l.b16 %v376
    %v1068 = vunpack.c.h.b16 %v376
    %v1069 = vunpack.c.l.b16 %v377
    %v1070 = vunpack.c.h.b16 %v377
    %v1071 = vunpack.c.l.b16 %v378
    %v1072 = vunpack.c.h.b16 %v378
    %v1073 = vunpack.c.l.b16 %v379
    %v1074 = vunpack.c.h.b16 %v379
    %v1075 = vunpack.c.l.b16 %v380
    %v1076 = vunpack.c.h.b16 %v380
    %v1077 = vunpack.c.l.b16 %v381
    %v1078 = vunpack.c.h.b16 %v381
    %v1079 = vunpack.c.l.b16 %v382
    %v1080 = vunpack.c.h.b16 %v382
    %v1081 = vunpack.c.l.b16 %v383
    %v1082 = vunpack.c.h.b16 %v383
    %v1083 = vunpack.c.l.b16 %v384
    %v1084 = vunpack.c.h.b16 %v384
    %v1085 = vunpack.c.l.b16 %v385
    %v1086 = vunpack.c.h.b16 %v385
    %v1087 = vunpack.c.l.b16 %v386
    %v1088 = vunpack.c.h.b16 %v386
    %v1089 = vunpack.c.l.b16 %v387
    %v1090 = vunpack.c.h.b16 %v387
    %v1091 = vunpack.c.l.b16 %v388
    %v1092 = vunpack.c.h.b16 %v388
    %v1093 = vunpack.c.l.b16 %v389
    %v1094 = vunpack.c.h.b16 %v389
    %v1095 = vunpack.c.l.b16 %v390
    %v1096 = vunpack.c.h.b16 %v390
    %v1097 = vunpack.c.l.b16 %v391
    %v1098 = vunpack.c.h.b16 %v391
    %v1099 = vunpack.c.l.b16 %v392
    %v1100 = vunpack.c.h.b16 %v392
    %v1101 = vunpack.c.l.b16 %v393
    %v1102 = vunpack.c.h.b16 %v393
    %v1103 = vunpack.c.l.b16 %v394
    %v1104 = vunpack.c.h.b16 %v394
    %v1105 = vunpack.c.l.b16 %v395
    %v1106 = vunpack.c.h.b16 %v395
    %v1107 = vunpack.c.l.b16 %v396
    %v1108 = vunpack.c.h.b16 %v396
    %v1109 = vunpack.c.l.b16 %v397
    %v1110 = vunpack.c.h.b16 %v397
    %v1111 = vunpack.c.l.b16 %v398
    %v1112 = vunpack.c.h.b16 %v398
    %v1113 = vunpack.c.l.b16 %v399
    %v1114 = vunpack.c.h.b16 %v399
    %v1115 = vunpack.c.l.b16 %v400
    %v1116 = vunpack.c.h.b16 %v400
    %v1117 = vunpack.c.l.b16 %v401
    %v1118 = vunpack.c.h.b16 %v401
    %v1119 = vunpack.c.l.b16 %v402
    %v1120 = vunpack.c.h.b16 %v402
    %v1121 = vunpack.c.l.b16 %v403
    %v1122 = vunpack.c.h.b16 %v403
    %v1123 = vunpack.c.l.b16 %v404
    %v1124 = vunpack.c.h.b16 %v404
    %v1125 = vunpack.c.l.b16 %v405
    %v1126 = vunpack.c.h.b16 %v405
    %v1127 = vunpack.c.l.b16 %v406
    %v1128 = vunpack.c.h.b16 %v406
    %v1129 = vunpack.c.l.b16 %v407
    %v1130 = vunpack.c.h.b16 %v407
    %v1131 = vunpack.c.l.b16 %v408
    %v1132 = vunpack.c.h.b16 %v408
    %v1133 = vunpack.c.l.b16 %v409
    %v1134 = vunpack.c.h.b16 %v409
    %v1135 = vunpack.c.l.b16 %v410
    %v1136 = vunpack.c.h.b16 %v410
    %v1137 = vunpack.c.l.b16 %v411
    %v1138 = vunpack.c.h.b16 %v411
    %v1139 = vunpack.c.l.b16 %v412
    %v1140 = vunpack.c.h.b16 %v412
    %v1141 = vunpack.c.l.b16 %v413
    %v1142 = vunpack.c.h.b16 %v413
    %v1143 = vunpack.c.l.b16 %v414
    %v1144 = vunpack.c.h.b16 %v414
    %v1145 = vunpack.c.l.b16 %v415
    %v1146 = vunpack.c.h.b16 %v415
    %v1147 = vunpack.c.l.b16 %v416
    %v1148 = vunpack.c.h.b16 %v416
    %v1149 = vunpack.c.l.b16 %v417
    %v1150 = vunpack.c.h.b16 %v417
    %v1151 = vunpack.c.l.b16 %v418
    %v1152 = vunpack.c.h.b16 %v418
    %v1153 = vunpack.c.l.b16 %v419
    %v1154 = vunpack.c.h.b16 %v419
    %v1155 = vunpack.c.l.b16 %v420
    %v1156 = vunpack.c.h.b16 %v420
    %v1157 = vunpack.c.l.b16 %v421
    %v1158 = vunpack.c.h.b16 %v421
    %v1159 = vunpack.c.l.b16 %v422
    %v1160 = vunpack.c.h.b16 %v422
    %v1161 = vunpack.c.l.b16 %v423
    %v1162 = vunpack.c.h.b16 %v423
    %v1163 = vunpack.c.l.b16 %v424
    %v1164 = vunpack.c.h.b16 %v424
    %v1165 = vunpack.c.l.b16 %v425
    %v1166 = vunpack.c.h.b16 %v425
    %v1167 = vunpack.c.l.b16 %v426
    %v1168 = vunpack.c.h.b16 %v426
    %v1169 = vunpack.c.l.b16 %v427
    %v1170 = vunpack.c.h.b16 %v427
    %v1171 = vunpack.c.l.b16 %v428
    %v1172 = vunpack.c.h.b16 %v428
    %v1173 = vunpack.c.l.b16 %v429
    %v1174 = vunpack.c.h.b16 %v429
    %v1175 = vunpack.c.l.b16 %v430
    %v1176 = vunpack.c.h.b16 %v430
    %v1177 = vunpack.c.l.b16 %v431
    %v1178 = vunpack.c.h.b16 %v431
    %v1179 = vunpack.c.l.b16 %v432
    %v1180 = vunpack.c.h.b16 %v432
    %v1181 = vunpack.c.l.b16 %v433
    %v1182 = vunpack.c.h.b16 %v433
    %v1183 = vunpack.c.l.b16 %v434
    %v1184 = vunpack.c.h.b16 %v434
    %v1185 = vunpack.c.l.b16 %v435
    %v1186 = vunpack.c.h.b16 %v435
    %v1187 = vunpack.c.l.b16 %v436
    %v1188 = vunpack.c.h.b16 %v436
    %v1189 = vunpack.c.l.b16 %v437
    %v1190 = vunpack.c.h.b16 %v437
    %v1191 = vunpack.c.l.b16 %v438
    %v1192 = vunpack.c.h.b16 %v438
    %v1193 = vunpack.c.l.b16 %v439
    %v1194 = vunpack.c.h.b16 %v439
    %v1195 = vunpack.c.l.b16 %v440
    %v1196 = vunpack.c.h.b16 %v440
    %v1197 = vunpack.c.l.b16 %v441
    %v1198 = vunpack.c.h.b16 %v441
    %v1199 = vunpack.c.l.b16 %v442
    %v1200 = vunpack.c.h.b16 %v442
    %v1201 = vunpack.c.l.b16 %v443
    %v1202 = vunpack.c.h.b16 %v443
    %v1203 = vunpack.c.l.b16 %v444
    %v1204 = vunpack.c.h.b16 %v444
    %v1205 = vunpack.c.l.b16 %v445
    %v1206 = vunpack.c.h.b16 %v445
    %v1207 = vunpack.c.l.b16 %v446
    %v1208 = vunpack.c.h.b16 %v446
    %v1209 = vunpack.c.l.b16 %v447
    %v1210 = vunpack.c.h.b16 %v447
    %v1211 = vunpack.c.l.b16 %v448
    %v1212 = vunpack.c.h.b16 %v448
    %v1213 = vunpack.c.l.b16 %v449
    %v1214 = vunpack.c.h.b16 %v449
    %v1215 = vunpack.c.l.b16 %v450
    %v1216 = vunpack.c.h.b16 %v450
    %v1217 = vunpack.c.l.b16 %v451
    %v1218 = vunpack.c.h.b16 %v451
    %v1219 = vunpack.c.l.b16 %v452
    %v1220 = vunpack.c.h.b16 %v452
    %v1221 = vunpack.c.l.b16 %v453
    %v1222 = vunpack.c.h.b16 %v453
    %v1223 = vunpack.c.l.b16 %v454
    %v1224 = vunpack.c.h.b16 %v454
    %v1225 = vunpack.c.l.b16 %v455
    %v1226 = vunpack.c.h.b16 %v455
    %v1227 = vunpack.c.l.b16 %v456
    %v1228 = vunpack.c.h.b16 %v456
    %v1229 = vunpack.c.l.b16 %v457
    %v1230 = vunpack.c.h.b16 %v457
    %v1231 = vunpack.c.l.b16 %v458
    %v1232 = vunpack.c.h.b16 %v458
    %v1233 = vunpack.c.l.b16 %v459
    %v1234 = vunpack.c.h.b16 %v459
    %v1235 = vunpack.c.l.b16 %v460
    %v1236 = vunpack.c.h.b16 %v460
    %v1237 = vunpack.c.l.b16 %v461
    %v1238 = vunpack.c.h.b16 %v461
    %v1239 = vunpack.c.l.b16 %v462
    %v1240 = vunpack.c.h.b16 %v462
    %v1241 = vunpack.c.l.b16 %v463
    %v1242 = vunpack.c.h.b16 %v463
    %v1243 = vunpack.c.l.b16 %v464
    %v1244 = vunpack.c.h.b16 %v464
    %v1245 = vunpack.c.l.b16 %v465
    %v1246 = vunpack.c.h.b16 %v465
    %v1247 = vunpack.c.l.b16 %v466
    %v1248 = vunpack.c.h.b16 %v466
    %v1249 = vunpack.c.l.b16 %v467
    %v1250 = vunpack.c.h.b16 %v467
    %v1251 = vunpack.c.l.b16 %v468
    %v1252 = vunpack.c.h.b16 %v468
    %v1253 = vunpack.c.l.b16 %v469
    %v1254 = vunpack.c.h.b16 %v469
    %v1255 = vunpack.c.l.b16 %v470
    %v1256 = vunpack.c.h.b16 %v470
    %v1257 = vunpack.c.l.b16 %v471
    %v1258 = vunpack.c.h.b16 %v471
    %v1259 = vunpack.c.l.b16 %v472
    %v1260 = vunpack.c.h.b16 %v472
    %v1261 = vunpack.c.l.b16 %v473
    %v1262 = vunpack.c.h.b16 %v473
    %v1263 = vunpack.c.l.b16 %v474
    %v1264 = vunpack.c.h.b16 %v474
    %v1265 = vunpack.c.l.b16 %v475
    %v1266 = vunpack.c.h.b16 %v475
    %v1267 = vunpack.c.l.b16 %v476
    %v1268 = vunpack.c.h.b16 %v476
    %v1269 = vunpack.c.l.b16 %v477
    %v1270 = vunpack.c.h.b16 %v477
    %v1271 = vunpack.c.l.b16 %v478
    %v1272 = vunpack.c.h.b16 %v478
    %v1273 = vunpack.c.l.b16 %v479
    %v1274 = vunpack.c.h.b16 %v479
    %v1275 = vunpack.c.l.b16 %v480
    %v1276 = vunpack.c.h.b16 %v480
    %v1277 = vunpack.c.l.b16 %v481
    %v1278 = vunpack.c.h.b16 %v481
    %v1279 = vunpack.c.l.b16 %v482
    %v1280 = vunpack.c.h.b16 %v482
    %v1281 = vunpack.c.l.b16 %v483
    %v1282 = vunpack.c.h.b16 %v483
    %v1283 = vunpack.c.l.b16 %v484
    %v1284 = vunpack.c.h.b16 %v484
    %v1285 = vunpack.c.l.b16 %v485
    %v1286 = vunpack.c.h.b16 %v485
    %v1287 = vunpack.c.l.b16 %v486
    %v1288 = vunpack.c.h.b16 %v486
    %v1289 = vunpack.c.l.b16 %v487
    %v1290 = vunpack.c.h.b16 %v487
    %v1291 = vunpack.c.l.b16 %v488
    %v1292 = vunpack.c.h.b16 %v488
    %v1293 = vunpack.c.l.b16 %v489
    %v1294 = vunpack.c.h.b16 %v489
    %v1295 = vunpack.c.l.b16 %v490
    %v1296 = vunpack.c.h.b16 %v490
    %v1297 = vunpack.c.l.b16 %v491
    %v1298 = vunpack.c.h.b16 %v491
    %v1299 = vunpack.c.l.b16 %v492
    %v1300 = vunpack.c.h.b16 %v492
    %v1301 = vunpack.c.l.b16 %v493
    %v1302 = vunpack.c.h.b16 %v493
    %v1303 = vunpack.c.l.b16 %v494
    %v1304 = vunpack.c.h.b16 %v494
    %v1305 = vunpack.c.l.b16 %v495
    %v1306 = vunpack.c.h.b16 %v495
    %v1307 = vunpack.c.l.b16 %v496
    %v1308 = vunpack.c.h.b16 %v496
    %v1309 = vunpack.c.l.b16 %v497
    %v1310 = vunpack.c.h.b16 %v497
    %v1311 = vunpack.c.l.b16 %v498
    %v1312 = vunpack.c.h.b16 %v498
    %v1313 = vunpack.c.l.b16 %v499
    %v1314 = vunpack.c.h.b16 %v499
    %v1315 = vunpack.c.l.b16 %v500
    %v1316 = vunpack.c.h.b16 %v500
    %v1317 = vunpack.c.l.b16 %v501
    %v1318 = vunpack.c.h.b16 %v501
    %v1319 = vunpack.c.l.b16 %v502
    %v1320 = vunpack.c.h.b16 %v502
    %v1321 = vunpack.c.l.b16 %v503
    %v1322 = vunpack.c.h.b16 %v503
    %v1323 = vunpack.c.l.b16 %v504
    %v1324 = vunpack.c.h.b16 %v504
    %v1325 = vunpack.c.l.b16 %v505
    %v1326 = vunpack.c.h.b16 %v505
    %v1327 = vunpack.c.l.b16 %v506
    %v1328 = vunpack.c.h.b16 %v506
    %v1329 = vunpack.c.l.b16 %v507
    %v1330 = vunpack.c.h.b16 %v507
    %v1331 = vunpack.c.l.b16 %v508
    %v1332 = vunpack.c.h.b16 %v508
    %v1333 = vunpack.c.l.b16 %v509
    %v1334 = vunpack.c.h.b16 %v509
    %v1335 = vunpack.c.l.b16 %v510
    %v1336 = vunpack.c.h.b16 %v510
    %v1337 = vunpack.c.l.b16 %v511
    %v1338 = vunpack.c.h.b16 %v511
    %v1339 = vunpack.c.l.b16 %v512
    %v1340 = vunpack.c.h.b16 %v512
    %v1341 = vunpack.c.l.b16 %v513
    %v1342 = vunpack.c.h.b16 %v513
    %v1343 = vunpack.c.l.b16 %v514
    %v1344 = vunpack.c.h.b16 %v514
    %v1345 = vunpack.c.l.b16 %v515
    %v1346 = vunpack.c.h.b16 %v515
    %v1347 = vunpack.c.l.b16 %v516
    %v1348 = vunpack.c.h.b16 %v516
    %v1349 = vunpack.c.l.b16 %v517
    %v1350 = vunpack.c.h.b16 %v517
    %v1351 = vunpack.c.l.b16 %v518
    %v1352 = vunpack.c.h.b16 %v518
    %v1353 = vunpack.c.l.b16 %v519
    %v1354 = vunpack.c.h.b16 %v519
    %v1355 = vunpack.c.l.b16 %v520
    %v1356 = vunpack.c.h.b16 %v520
    %v1357 = vunpack.c.l.b16 %v521
    %v1358 = vunpack.c.h.b16 %v521
    %v1359 = vunpack.c.l.b16 %v522
    %v1360 = vunpack.c.h.b16 %v522
    %v1361 = vunpack.c.l.b16 %v523
    %v1362 = vunpack.c.h.b16 %v523
    %v1363 = vunpack.c.l.b16 %v524
    %v1364 = vunpack.c.h.b16 %v524
    %v1365 = vunpack.c.l.b16 %v525
    %v1366 = vunpack.c.h.b16 %v525
    %v1367 = vunpack.c.l.b16 %v526
    %v1368 = vunpack.c.h.b16 %v526
    %v1369 = vunpack.c.l.b16 %v527
    %v1370 = vunpack.c.h.b16 %v527
    %v1371 = vunpack.c.l.b16 %v528
    %v1372 = vunpack.c.h.b16 %v528
    %v1373 = vunpack.c.l.b16 %v529
    %v1374 = vunpack.c.h.b16 %v529
    %v1375 = vunpack.c.l.b16 %v530
    %v1376 = vunpack.c.h.b16 %v530
    %v1377 = vunpack.c.l.b16 %v531
    %v1378 = vunpack.c.h.b16 %v531
    %v1379 = vunpack.c.l.b16 %v532
    %v1380 = vunpack.c.h.b16 %v532
    %v1381 = vunpack.c.l.b16 %v533
    %v1382 = vunpack.c.h.b16 %v533
    %v1383 = vunpack.c.l.b16 %v534
    %v1384 = vunpack.c.h.b16 %v534
    %v1385 = vunpack.c.l.b16 %v535
    %v1386 = vunpack.c.h.b16 %v535
    %v1387 = vunpack.c.l.b16 %v536
    %v1388 = vunpack.c.h.b16 %v536
    %v1389 = vunpack.c.l.b16 %v537
    %v1390 = vunpack.c.h.b16 %v537
    %v1391 = vunpack.c.l.b16 %v538
    %v1392 = vunpack.c.h.b16 %v538
    %v1393 = vunpack.c.l.b16 %v539
    %v1394 = vunpack.c.h.b16 %v539
    %v1395 = vunpack.c.l.b16 %v540
    %v1396 = vunpack.c.h.b16 %v540
    %v1397 = vunpack.c.l.b16 %v541
    %v1398 = vunpack.c.h.b16 %v541
    %v1399 = vunpack.c.l.b16 %v542
    %v1400 = vunpack.c.h.b16 %v542
    %v1401 = vunpack.c.l.b16 %v543
    %v1402 = vunpack.c.h.b16 %v543
    %v1403 = vunpack.c.l.b16 %v544
    %v1404 = vunpack.c.h.b16 %v544
    %v1405 = vunpack.c.l.b16 %v545
    %v1406 = vunpack.c.h.b16 %v545
    %v1407 = vunpack.c.l.b16 %v546
    %v1408 = vunpack.c.h.b16 %v546
    %v1409 = vunpack.c.l.b16 %v547
    %v1410 = vunpack.c.h.b16 %v547
    %v1411 = vunpack.c.l.b16 %v548
    %v1412 = vunpack.c.h.b16 %v548
    %v1413 = vunpack.c.l.b16 %v549
    %v1414 = vunpack.c.h.b16 %v549
    %v1415 = vunpack.c.l.b16 %v550
    %v1416 = vunpack.c.h.b16 %v550
    %v1417 = vunpack.c.l.b16 %v551
    %v1418 = vunpack.c.h.b16 %v551
    %v1419 = vunpack.c.l.b16 %v552
    %v1420 = vunpack.c.h.b16 %v552
    %v1421 = vunpack.c.l.b16 %v553
    %v1422 = vunpack.c.h.b16 %v553
    %v1423 = vunpack.c.l.b16 %v554
    %v1424 = vunpack.c.h.b16 %v554
    %v1425 = vunpack.c.l.b16 %v555
    %v1426 = vunpack.c.h.b16 %v555
    %v1427 = vunpack.c.l.b16 %v556
    %v1428 = vunpack.c.h.b16 %v556
    %v1429 = vunpack.c.l.b16 %v557
    %v1430 = vunpack.c.h.b16 %v557
    %v1431 = vunpack.c.l.b16 %v558
    %v1432 = vunpack.c.h.b16 %v558
    %v1433 = vunpack.c.l.b16 %v559
    %v1434 = vunpack.c.h.b16 %v559
    %v1435 = vunpack.c.l.b16 %v560
    %v1436 = vunpack.c.h.b16 %v560
    %v1437 = vunpack.c.l.b16 %v561
    %v1438 = vunpack.c.h.b16 %v561
    %v1439 = vunpack.c.l.b16 %v562
    %v1440 = vunpack.c.h.b16 %v562
    %v1441 = vpack.c.b16 %v871, %v865
    %v1442 = vpack.c.b16 %v872, %v866
    %v1443 = vpack.c.b16 %v873, %v867
    %v1444 = vpack.c.b16 %v874, %v868
    %v1445 = vpack.c.b16 %v875, %v869
    %v1446 = vpack.c.b16 %v876, %v870
    %v1447 = vpack.c.b16 %v883, %v877
    %v1448 = vpack.c.b16 %v884, %v878
    %v1449 = vpack.c.b16 %v885, %v879
    %v1450 = vpack.c.b16 %v886, %v880
    %v1451 = vpack.c.b16 %v887, %v881
    %v1452 = vpack.c.b16 %v888, %v882
    %v1453 = vpack.c.b16 %v895, %v889
    %v1454 = vpack.c.b16 %v896, %v890
    %v1455 = vpack.c.b16 %v897, %v891
    %v1456 = vpack.c.b16 %v898, %v892
    %v1457 = vpack.c.b16 %v899, %v893
    %v1458 = vpack.c.b16 %v900, %v894
    %v1459 = vpack.c.b16 %v907, %v901
    %v1460 = vpack.c.b16 %v908, %v902
    %v1461 = vpack.c.b16 %v909, %v903
    %v1462 = vpack.c.b16 %v910, %v904
    %v1463 = vpack.c.b16 %v911, %v905
    %v1464 = vpack.c.b16 %v912, %v906
    %v1465 = vpack.c.b16 %v919, %v913
    %v1466 = vpack.c.b16 %v920, %v914
    %v1467 = vpack.c.b16 %v921, %v915
    %v1468 = vpack.c.b16 %v922, %v916
    %v1469 = vpack.c.b16 %v923, %v917
    %v1470 = vpack.c.b16 %v924, %v918
    %v1471 = vpack.c.b16 %v931, %v925
    %v1472 = vpack.c.b16 %v932, %v926
    %v1473 = vpack.c.b16 %v933, %v927
    %v1474 = vpack.c.b16 %v934, %v928
    %v1475 = vpack.c.b16 %v935, %v929
    %v1476 = vpack.c.b16 %v936, %v930
    %v1477 = vpack.c.b16 %v943, %v937
    %v1478 = vpack.c.b16 %v944, %v938
    %v1479 = vpack.c.b16 %v945, %v939
    %v1480 = vpack.c.b16 %v946, %v940
    %v1481 = vpack.c.b16 %v947, %v941
    %v1482 = vpack.c.b16 %v948, %v942
    %v1483 = vpack.c.b16 %v955, %v949
    %v1484 = vpack.c.b16 %v956, %v950
    %v1485 = vpack.c.b16 %v957, %v951
    %v1486 = vpack.c.b16 %v958, %v952
    %v1487 = vpack.c.b16 %v959, %v953
    %v1488 = vpack.c.b16 %v960, %v954
    %v1489 = vpack.c.b16 %v967, %v961
    %v1490 = vpack.c.b16 %v968, %v962
    %v1491 = vpack.c.b16 %v969, %v963
    %v1492 = vpack.c.b16 %v970, %v964
    %v1493 = vpack.c.b16 %v971, %v965
    %v1494 = vpack.c.b16 %v972, %v966
    %v1495 = vpack.c.b16 %v979, %v973
    %v1496 = vpack.c.b16 %v980, %v974
    %v1497 = vpack.c.b16 %v981, %v975
    %v1498 = vpack.c.b16 %v982, %v976
    %v1499 = vpack.c.b16 %v983, %v977
    %v1500 = vpack.c.b16 %v984, %v978
    %v1501 = vpack.c.b16 %v991, %v985
    %v1502 = vpack.c.b16 %v992, %v986
    %v1503 = vpack.c.b16 %v993, %v987
    %v1504 = vpack.c.b16 %v994, %v988
    %v1505 = vpack.c.b16 %v995, %v989
    %v1506 = vpack.c.b16 %v996, %v990
    %v1507 = vpack.c.b16 %v1003, %v997
    %v1508 = vpack.c.b16 %v1004, %v998
    %v1509 = vpack.c.b16 %v1005, %v999
    %v1510 = vpack.c.b16 %v1006, %v1000
    %v1511 = vpack.c.b16 %v1007, %v1001
    %v1512 = vpack.c.b16 %v1008, %v1002
    %v1513 = vpack.c.b16 %v1015, %v1009
    %v1514 = vpack.c.b16 %v1016, %v1010
    %v1515 = vpack.c.b16 %v1017, %v1011
    %v1516 = vpack.c.b16 %v1018, %v1012
    %v1517 = vpack.c.b16 %v1019, %v1013
    %v1518 = vpack.c.b16 %v1020, %v1014
    %v1519 = vpack.c.b16 %v1027, %v1021
    %v1520 = vpack.c.b16 %v1028, %v1022
    %v1521 = vpack.c.b16 %v1029, %v1023
    %v1522 = vpack.c.b16 %v1030, %v1024
    %v1523 = vpack.c.b16 %v1031, %v1025
    %v1524 = vpack.c.b16 %v1032, %v1026
    %v1525 = vpack.c.b16 %v1039, %v1033
    %v1526 = vpack.c.b16 %v1040, %v1034
    %v1527 = vpack.c.b16 %v1041, %v1035
    %v1528 = vpack.c.b16 %v1042, %v1036
    %v1529 = vpack.c.b16 %v1043, %v1037
    %v1530 = vpack.c.b16 %v1044, %v1038
    %v1531 = vpack.c.b16 %v1051, %v1045
    %v1532 = vpack.c.b16 %v1052, %v1046
    %v1533 = vpack.c.b16 %v1053, %v1047
    %v1534 = vpack.c.b16 %v1054, %v1048
    %v1535 = vpack.c.b16 %v1055, %v1049
    %v1536 = vpack.c.b16 %v1056, %v1050
    %v1537 = vpack.c.b16 %v1063, %v1057
    %v1538 = vpack.c.b16 %v1064, %v1058
    %v1539 = vpack.c.b16 %v1065, %v1059
    %v1540 = vpack.c.b16 %v1066, %v1060
    %v1541 = vpack.c.b16 %v1067, %v1061
    %v1542 = vpack.c.b16 %v1068, %v1062
    %v1543 = vpack.c.b16 %v1075, %v1069
    %v1544 = vpack.c.b16 %v1076, %v1070
    %v1545 = vpack.c.b16 %v1077, %v1071
    %v1546 = vpack.c.b16 %v1078, %v1072
    %v1547 = vpack.c.b16 %v1079, %v1073
    %v1548 = vpack.c.b16 %v1080, %v1074
    %v1549 = vpack.c.b16 %v1087, %v1081
    %v1550 = vpack.c.b16 %v1088, %v1082
    %v1551 = vpack.c.b16 %v1089, %v1083
    %v1552 = vpack.c.b16 %v1090, %v1084
    %v1553 = vpack.c.b16 %v1091, %v1085
    %v1554 = vpack.c.b16 %v1092, %v1086
    %v1555 = vpack.c.b16 %v1099, %v1093
    %v1556 = vpack.c.b16 %v1100, %v1094
    %v1557 = vpack.c.b16 %v1101, %v1095
    %v1558 = vpack.c.b16 %v1102, %v1096
    %v1559 = vpack.c.b16 %v1103, %v1097
    %v1560 = vpack.c.b16 %v1104, %v1098
    %v1561 = vpack.c.b16 %v1111, %v1105
    %v1562 = vpack.c.b16 %v1112, %v1106
    %v1563 = vpack.c.b16 %v1113, %v1107
    %v1564 = vpack.c.b16 %v1114, %v1108
    %v1565 = vpack.c.b16 %v1115, %v1109
    %v1566 = vpack.c.b16 %v1116, %v1110
    %v1567 = vpack.c.b16 %v1123, %v1117
    %v1568 = vpack.c.b16 %v1124, %v1118
    %v1569 = vpack.c.b16 %v1125, %v1119
    %v1570 = vpack.c.b16 %v1126, %v1120
    %v1571 = vpack.c.b16 %v1127, %v1121
    %v1572 = vpack.c.b16 %v1128, %v1122
    %v1573 = vpack.c.b16 %v1135, %v1129
    %v1574 = vpack.c.b16 %v1136, %v1130
    %v1575 = vpack.c.b16 %v1137, %v1131
    %v1576 = vpack.c.b16 %v1138, %v1132
    %v1577 = vpack.c.b16 %v1139, %v1133
    %v1578 = vpack.c.b16 %v1140, %v1134
    %v1579 = vpack.c.b16 %v1147, %v1141
    %v1580 = vpack.c.b16 %v1148, %v1142
    %v1581 = vpack.c.b16 %v1149, %v1143
    %v1582 = vpack.c.b16 %v1150, %v1144
    %v1583 = vpack.c.b16 %v1151, %v1145
    %v1584 = vpack.c.b16 %v1152, %v1146
    %v1585 = vpack.c.b16 %v1159, %v1153
    %v1586 = vpack.c.b16 %v1160, %v1154
    %v1587 = vpack.c.b16 %v1161, %v1155
    %v1588 = vpack.c.b16 %v1162, %v1156
    %v1589 = vpack.c.b16 %v1163, %v1157
    %v1590 = vpack.c.b16 %v1164, %v1158
    %v1591 = vpack.c.b16 %v1171, %v1165
    %v1592 = vpack.c.b16 %v1172, %v1166
    %v1593 = vpack.c.b16 %v1173, %v1167
    %v1594 = vpack.c.b16 %v1174, %v1168
    %v1595 = vpack.c.b16 %v1175, %v1169
    %v1596 = vpack.c.b16 %v1176, %v1170
    %v1597 = vpack.c.b16 %v1183, %v1177
    %v1598 = vpack.c.b16 %v1184, %v1178
    %v1599 = vpack.c.b16 %v1185, %v1179
    %v1600 = vpack.c.b16 %v1186, %v1180
    %v1601 = vpack.c.b16 %v1187, %v1181
    %v1602 = vpack.c.b16 %v1188, %v1182
    %v1603 = vpack.c.b16 %v1195, %v1189
    %v1604 = vpack.c.b16 %v1196, %v1190
    %v1605 = vpack.c.b16 %v1197, %v1191
    %v1606 = vpack.c.b16 %v1198, %v1192
    %v1607 = vpack.c.b16 %v1199, %v1193
    %v1608 = vpack.c.b16 %v1200, %v1194
    %v1609 = vpack.c.b16 %v1207, %v1201
    %v1610 = vpack.c.b16 %v1208, %v1202
    %v1611 = vpack.c.b16 %v1209, %v1203
    %v1612 = vpack.c.b16 %v1210, %v1204
    %v1613 = vpack.c.b16 %v1211, %v1205
    %v1614 = vpack.c.b16 %v1212, %v1206
    %v1615 = vpack.c.b16 %v1219, %v1213
    %v1616 = vpack.c.b16 %v1220, %v1214
    %v1617 = vpack.c.b16 %v1221, %v1215
    %v1618 = vpack.c.b16 %v1222, %v1216
    %v1619 = vpack.c.b16 %v1223, %v1217
    %v1620 = vpack.c.b16 %v1224, %v1218
    %v1621 = vpack.c.b16 %v1231, %v1225
    %v1622 = vpack.c.b16 %v1232, %v1226
    %v1623 = vpack.c.b16 %v1233, %v1227
    %v1624 = vpack.c.b16 %v1234, %v1228
    %v1625 = vpack.c.b16 %v1235, %v1229
    %v1626 = vpack.c.b16 %v1236, %v1230
    %v1627 = vpack.c.b16 %v1243, %v1237
    %v1628 = vpack.c.b16 %v1244, %v1238
    %v1629 = vpack.c.b16 %v1245, %v1239
    %v1630 = vpack.c.b16 %v1246, %v1240
    %v1631 = vpack.c.b16 %v1247, %v1241
    %v1632 = vpack.c.b16 %v1248, %v1242
    %v1633 = vpack.c.b16 %v1255, %v1249
    %v1634 = vpack.c.b16 %v1256, %v1250
    %v1635 = vpack.c.b16 %v1257, %v1251
    %v1636 = vpack.c.b16 %v1258, %v1252
    %v1637 = vpack.c.b16 %v1259, %v1253
    %v1638 = vpack.c.b16 %v1260, %v1254
    %v1639 = vpack.c.b16 %v1267, %v1261
    %v1640 = vpack.c.b16 %v1268, %v1262
    %v1641 = vpack.c.b16 %v1269, %v1263
    %v1642 = vpack.c.b16 %v1270, %v1264
    %v1643 = vpack.c.b16 %v1271, %v1265
    %v1644 = vpack.c.b16 %v1272, %v1266
    %v1645 = vpack.c.b16 %v1279, %v1273
    %v1646 = vpack.c.b16 %v1280, %v1274
    %v1647 = vpack.c.b16 %v1281, %v1275
    %v1648 = vpack.c.b16 %v1282, %v1276
    %v1649 = vpack.c.b16 %v1283, %v1277
    %v1650 = vpack.c.b16 %v1284, %v1278
    %v1651 = vpack.c.b16 %v1291, %v1285
    %v1652 = vpack.c.b16 %v1292, %v1286
    %v1653 = vpack.c.b16 %v1293, %v1287
    %v1654 = vpack.c.b16 %v1294, %v1288
    %v1655 = vpack.c.b16 %v1295, %v1289
    %v1656 = vpack.c.b16 %v1296, %v1290
    %v1657 = vpack.c.b16 %v1303, %v1297
    %v1658 = vpack.c.b16 %v1304, %v1298
    %v1659 = vpack.c.b16 %v1305, %v1299
    %v1660 = vpack.c.b16 %v1306, %v1300
    %v1661 = vpack.c.b16 %v1307, %v1301
    %v1662 = vpack.c.b16 %v1308, %v1302
    %v1663 = vpack.c.b16 %v1315, %v1309
    %v1664 = vpack.c.b16 %v1316, %v1310
    %v1665 = vpack.c.b16 %v1317, %v1311
    %v1666 = vpack.c.b16 %v1318, %v1312
    %v1667 = vpack.c.b16 %v1319, %v1313
    %v1668 = vpack.c.b16 %v1320, %v1314
    %v1669 = vpack.c.b16 %v1327, %v1321
    %v1670 = vpack.c.b16 %v1328, %v1322
    %v1671 = vpack.c.b16 %v1329, %v1323
    %v1672 = vpack.c.b16 %v1330, %v1324
    %v1673 = vpack.c.b16 %v1331, %v1325
    %v1674 = vpack.c.b16 %v1332, %v1326
    %v1675 = vpack.c.b16 %v1339, %v1333
    %v1676 = vpack.c.b16 %v1340, %v1334
    %v1677 = vpack.c.b16 %v1341, %v1335
    %v1678 = vpack.c.b16 %v1342, %v1336
    %v1679 = vpack.c.b16 %v1343, %v1337
    %v1680 = vpack.c.b16 %v1344, %v1338
    %v1681 = vpack.c.b16 %v1351, %v1345
    %v1682 = vpack.c.b16 %v1352, %v1346
    %v1683 = vpack.c.b16 %v1353, %v1347
    %v1684 = vpack.c.b16 %v1354, %v1348
    %v1685 = vpack.c.b16 %v1355, %v1349
    %v1686 = vpack.c.b16 %v1356, %v1350
    %v1687 = vpack.c.b16 %v1363, %v1357
    %v1688 = vpack.c.b16 %v1364, %v1358
    %v1689 = vpack.c.b16 %v1365, %v1359
    %v1690 = vpack.c.b16 %v1366, %v1360
    %v1691 = vpack.c.b16 %v1367, %v1361
    %v1692 = vpack.c.b16 %v1368, %v1362
    %v1693 = vpack.c.b16 %v1375, %v1369
    %v1694 = vpack.c.b16 %v1376, %v1370
    %v1695 = vpack.c.b16 %v1377, %v1371
    %v1696 = vpack.c.b16 %v1378, %v1372
    %v1697 = vpack.c.b16 %v1379, %v1373
    %v1698 = vpack.c.b16 %v1380, %v1374
    %v1699 = vpack.c.b16 %v1387, %v1381
    %v1700 = vpack.c.b16 %v1388, %v1382
    %v1701 = vpack.c.b16 %v1389, %v1383
    %v1702 = vpack.c.b16 %v1390, %v1384
    %v1703 = vpack.c.b16 %v1391, %v1385
    %v1704 = vpack.c.b16 %v1392, %v1386
    %v1705 = vpack.c.b16 %v1399, %v1393
    %v1706 = vpack.c.b16 %v1400, %v1394
    %v1707 = vpack.c.b16 %v1401, %v1395
    %v1708 = vpack.c.b16 %v1402, %v1396
    %v1709 = vpack.c.b16 %v1403, %v1397
    %v1710 = vpack.c.b16 %v1404, %v1398
    %v1711 = vpack.c.b16 %v1411, %v1405
    %v1712 = vpack.c.b16 %v1412, %v1406
    %v1713 = vpack.c.b16 %v1413, %v1407
    %v1714 = vpack.c.b16 %v1414, %v1408
    %v1715 = vpack.c.b16 %v1415, %v1409
    %v1716 = vpack.c.b16 %v1416, %v1410
    %v1717 = vpack.c.b16 %v1423, %v1417
    %v1718 = vpack.c.b16 %v1424, %v1418
    %v1719 = vpack.c.b16 %v1425, %v1419
    %v1720 = vpack.c.b16 %v1426, %v1420
    %v1721 = vpack.c.b16 %v1427, %v1421
    %v1722 = vpack.c.b16 %v1428, %v1422
    %v1723 = vpack.c.b16 %v1435, %v1429
    %v1724 = vpack.c.b16 %v1436, %v1430
    %v1725 = vpack.c.b16 %v1437, %v1431
    %v1726 = vpack.c.b16 %v1438, %v1432
    %v1727 = vpack.c.b16 %v1439, %v1433
    %v1728 = vpack.c.b16 %v1440, %v1434
    %2017 = vmatpush.bf16.msra.mxu0 %v1483
    %2018 = vmatpush.bf16.msra.mxu0 %v1477
    %2019 = vmatpush.bf16.msra.mxu0 %v1471
    %2020 = vmatpush.bf16.msra.mxu0 %v1465
    %2021 = vmatpush.bf16.msra.mxu0 %v1459
    %2022 = vmatpush.bf16.msra.mxu0 %v1453
    %2023 = vmatpush.bf16.msra.mxu0 %v1447
    %2024 = vmatpush.bf16.msra.mxu0 %v1441
    %2025 = vmatmul.bf16.gmra.mxu0 %v269
    %v2026 = vpop.f32.mrf.mxu0
    %v2027 = vadd.f32 %v565, %v2026
    %v2028 = vpop.f32.mrf.mxu0
    %v2029 = vadd.f32 %v565, %v2028
    %2030 = vdwg.mxu0
    %2031 = vmatpush.bf16.msra.mxu0 %v1531
    %2032 = vmatpush.bf16.msra.mxu0 %v1525
    %2033 = vmatpush.bf16.msra.mxu0 %v1519
    %2034 = vmatpush.bf16.msra.mxu0 %v1513
    %2035 = vmatpush.bf16.msra.mxu0 %v1507
    %2036 = vmatpush.bf16.msra.mxu0 %v1501
    %2037 = vmatpush.bf16.msra.mxu0 %v1495
    %2038 = vmatpush.bf16.msra.mxu0 %v1489
    %2039 = vmatmul.bf16.gmra.mxu0 %v270
    %v2040 = vpop.f32.mrf.mxu0
    %v2041 = vadd.f32 %v2027, %v2040
    %v2042 = vpop.f32.mrf.mxu0
    %v2043 = vadd.f32 %v2029, %v2042
    %2044 = vdwg.mxu0
    %2045 = vmatpush.bf16.msra.mxu0 %v1579
    %2046 = vmatpush.bf16.msra.mxu0 %v1573
    %2047 = vmatpush.bf16.msra.mxu0 %v1567
    %2048 = vmatpush.bf16.msra.mxu0 %v1561
    %2049 = vmatpush.bf16.msra.mxu0 %v1555
    %2050 = vmatpush.bf16.msra.mxu0 %v1549
    %2051 = vmatpush.bf16.msra.mxu0 %v1543
    %2052 = vmatpush.bf16.msra.mxu0 %v1537
    %2053 = vmatmul.bf16.gmra.mxu0 %v271
    %v2054 = vpop.f32.mrf.mxu0
    %v2055 = vadd.f32 %v2041, %v2054
    %v2056 = vpop.f32.mrf.mxu0
    %v2057 = vadd.f32 %v2043, %v2056
    %2058 = vdwg.mxu0
    %2059 = vmatpush.bf16.msra.mxu0 %v1627
    %2060 = vmatpush.bf16.msra.mxu0 %v1621
    %2061 = vmatpush.bf16.msra.mxu0 %v1615
    %2062 = vmatpush.bf16.msra.mxu0 %v1609
    %2063 = vmatpush.bf16.msra.mxu0 %v1603
    %2064 = vmatpush.bf16.msra.mxu0 %v1597
    %2065 = vmatpush.bf16.msra.mxu0 %v1591
    %2066 = vmatpush.bf16.msra.mxu0 %v1585
    %2067 = vmatmul.bf16.gmra.mxu0 %v272
    %v2068 = vpop.f32.mrf.mxu0
    %v2069 = vadd.f32 %v2055, %v2068
    %v2070 = vpop.f32.mrf.mxu0
    %v2071 = vadd.f32 %v2057, %v2070
    %2072 = vdwg.mxu0
    %2073 = vmatpush.bf16.msra.mxu0 %v1675
    %2074 = vmatpush.bf16.msra.mxu0 %v1669
    %2075 = vmatpush.bf16.msra.mxu0 %v1663
    %2076 = vmatpush.bf16.msra.mxu0 %v1657
    %2077 = vmatpush.bf16.msra.mxu0 %v1651
    %2078 = vmatpush.bf16.msra.mxu0 %v1645
    %2079 = vmatpush.bf16.msra.mxu0 %v1639
    %2080 = vmatpush.bf16.msra.mxu0 %v1633
    %2081 = vmatmul.bf16.gmra.mxu0 %v273
    %v2082 = vpop.f32.mrf.mxu0
    %v2083 = vadd.f32 %v2069, %v2082
    %v2084 = vpop.f32.mrf.mxu0
    %v2085 = vadd.f32 %v2071, %v2084
    %2086 = vdwg.mxu0
    %2087 = vmatpush.bf16.msra.mxu0 %v1723
    %2088 = vmatpush.bf16.msra.mxu0 %v1717
    %2089 = vmatpush.bf16.msra.mxu0 %v1711
    %2090 = vmatpush.bf16.msra.mxu0 %v1705
    %2091 = vmatpush.bf16.msra.mxu0 %v1699
    %2092 = vmatpush.bf16.msra.mxu0 %v1693
    %2093 = vmatpush.bf16.msra.mxu0 %v1687
    %2094 = vmatpush.bf16.msra.mxu0 %v1681
    %2095 = vmatmul.bf16.gmra.mxu0 %v274
    %v2096 = vpop.f32.mrf.mxu0
    %v2097 = vadd.f32 %v2083, %v2096
    %v2098 = vpop.f32.mrf.mxu0
    %v2099 = vadd.f32 %v2085, %v2098
    %2100 = vdwg.mxu0
    %2101 = vmatpush.bf16.msra.mxu0 %v1484
    %2102 = vmatpush.bf16.msra.mxu0 %v1478
    %2103 = vmatpush.bf16.msra.mxu0 %v1472
    %2104 = vmatpush.bf16.msra.mxu0 %v1466
    %2105 = vmatpush.bf16.msra.mxu0 %v1460
    %2106 = vmatpush.bf16.msra.mxu0 %v1454
    %2107 = vmatpush.bf16.msra.mxu0 %v1448
    %2108 = vmatpush.bf16.msra.mxu0 %v1442
    %2109 = vmatmul.bf16.gmra.mxu0 %v269
    %v2110 = vpop.f32.mrf.mxu0
    %v2111 = vadd.f32 %v566, %v2110
    %v2112 = vpop.f32.mrf.mxu0
    %v2113 = vadd.f32 %v566, %v2112
    %2114 = vdwg.mxu0
    %2115 = vmatpush.bf16.msra.mxu0 %v1532
    %2116 = vmatpush.bf16.msra.mxu0 %v1526
    %2117 = vmatpush.bf16.msra.mxu0 %v1520
    %2118 = vmatpush.bf16.msra.mxu0 %v1514
    %2119 = vmatpush.bf16.msra.mxu0 %v1508
    %2120 = vmatpush.bf16.msra.mxu0 %v1502
    %2121 = vmatpush.bf16.msra.mxu0 %v1496
    %2122 = vmatpush.bf16.msra.mxu0 %v1490
    %2123 = vmatmul.bf16.gmra.mxu0 %v270
    %v2124 = vpop.f32.mrf.mxu0
    %v2125 = vadd.f32 %v2111, %v2124
    %v2126 = vpop.f32.mrf.mxu0
    %v2127 = vadd.f32 %v2113, %v2126
    %2128 = vdwg.mxu0
    %2129 = vmatpush.bf16.msra.mxu0 %v1580
    %2130 = vmatpush.bf16.msra.mxu0 %v1574
    %2131 = vmatpush.bf16.msra.mxu0 %v1568
    %2132 = vmatpush.bf16.msra.mxu0 %v1562
    %2133 = vmatpush.bf16.msra.mxu0 %v1556
    %2134 = vmatpush.bf16.msra.mxu0 %v1550
    %2135 = vmatpush.bf16.msra.mxu0 %v1544
    %2136 = vmatpush.bf16.msra.mxu0 %v1538
    %2137 = vmatmul.bf16.gmra.mxu0 %v271
    %v2138 = vpop.f32.mrf.mxu0
    %v2139 = vadd.f32 %v2125, %v2138
    %v2140 = vpop.f32.mrf.mxu0
    %v2141 = vadd.f32 %v2127, %v2140
    %2142 = vdwg.mxu0
    %2143 = vmatpush.bf16.msra.mxu0 %v1628
    %2144 = vmatpush.bf16.msra.mxu0 %v1622
    %2145 = vmatpush.bf16.msra.mxu0 %v1616
    %2146 = vmatpush.bf16.msra.mxu0 %v1610
    %2147 = vmatpush.bf16.msra.mxu0 %v1604
    %2148 = vmatpush.bf16.msra.mxu0 %v1598
    %2149 = vmatpush.bf16.msra.mxu0 %v1592
    %2150 = vmatpush.bf16.msra.mxu0 %v1586
    %2151 = vmatmul.bf16.gmra.mxu0 %v272
    %v2152 = vpop.f32.mrf.mxu0
    %v2153 = vadd.f32 %v2139, %v2152
    %v2154 = vpop.f32.mrf.mxu0
    %v2155 = vadd.f32 %v2141, %v2154
    %2156 = vdwg.mxu0
    %2157 = vmatpush.bf16.msra.mxu0 %v1676
    %2158 = vmatpush.bf16.msra.mxu0 %v1670
    %2159 = vmatpush.bf16.msra.mxu0 %v1664
    %2160 = vmatpush.bf16.msra.mxu0 %v1658
    %2161 = vmatpush.bf16.msra.mxu0 %v1652
    %2162 = vmatpush.bf16.msra.mxu0 %v1646
    %2163 = vmatpush.bf16.msra.mxu0 %v1640
    %2164 = vmatpush.bf16.msra.mxu0 %v1634
    %2165 = vmatmul.bf16.gmra.mxu0 %v273
    %v2166 = vpop.f32.mrf.mxu0
    %v2167 = vadd.f32 %v2153, %v2166
    %v2168 = vpop.f32.mrf.mxu0
    %v2169 = vadd.f32 %v2155, %v2168
    %2170 = vdwg.mxu0
    %2171 = vmatpush.bf16.msra.mxu0 %v1724
    %2172 = vmatpush.bf16.msra.mxu0 %v1718
    %2173 = vmatpush.bf16.msra.mxu0 %v1712
    %2174 = vmatpush.bf16.msra.mxu0 %v1706
    %2175 = vmatpush.bf16.msra.mxu0 %v1700
    %2176 = vmatpush.bf16.msra.mxu0 %v1694
    %2177 = vmatpush.bf16.msra.mxu0 %v1688
    %2178 = vmatpush.bf16.msra.mxu0 %v1682
    %2179 = vmatmul.bf16.gmra.mxu0 %v274
    %v2180 = vpop.f32.mrf.mxu0
    %v2181 = vadd.f32 %v2167, %v2180
    %v2182 = vpop.f32.mrf.mxu0
    %v2183 = vadd.f32 %v2169, %v2182
    %2184 = vdwg.mxu0
    %2185 = vmatpush.bf16.msra.mxu0 %v1485
    %2186 = vmatpush.bf16.msra.mxu0 %v1479
    %2187 = vmatpush.bf16.msra.mxu0 %v1473
    %2188 = vmatpush.bf16.msra.mxu0 %v1467
    %2189 = vmatpush.bf16.msra.mxu0 %v1461
    %2190 = vmatpush.bf16.msra.mxu0 %v1455
    %2191 = vmatpush.bf16.msra.mxu0 %v1449
    %2192 = vmatpush.bf16.msra.mxu0 %v1443
    %2193 = vmatmul.bf16.gmra.mxu0 %v269
    %v2194 = vpop.f32.mrf.mxu0
    %v2195 = vadd.f32 %v567, %v2194
    %v2196 = vpop.f32.mrf.mxu0
    %v2197 = vadd.f32 %v567, %v2196
    %2198 = vdwg.mxu0
    %2199 = vmatpush.bf16.msra.mxu0 %v1533
    %2200 = vmatpush.bf16.msra.mxu0 %v1527
    %2201 = vmatpush.bf16.msra.mxu0 %v1521
    %2202 = vmatpush.bf16.msra.mxu0 %v1515
    %2203 = vmatpush.bf16.msra.mxu0 %v1509
    %2204 = vmatpush.bf16.msra.mxu0 %v1503
    %2205 = vmatpush.bf16.msra.mxu0 %v1497
    %2206 = vmatpush.bf16.msra.mxu0 %v1491
    %2207 = vmatmul.bf16.gmra.mxu0 %v270
    %v2208 = vpop.f32.mrf.mxu0
    %v2209 = vadd.f32 %v2195, %v2208
    %v2210 = vpop.f32.mrf.mxu0
    %v2211 = vadd.f32 %v2197, %v2210
    %2212 = vdwg.mxu0
    %2213 = vmatpush.bf16.msra.mxu0 %v1581
    %2214 = vmatpush.bf16.msra.mxu0 %v1575
    %2215 = vmatpush.bf16.msra.mxu0 %v1569
    %2216 = vmatpush.bf16.msra.mxu0 %v1563
    %2217 = vmatpush.bf16.msra.mxu0 %v1557
    %2218 = vmatpush.bf16.msra.mxu0 %v1551
    %2219 = vmatpush.bf16.msra.mxu0 %v1545
    %2220 = vmatpush.bf16.msra.mxu0 %v1539
    %2221 = vmatmul.bf16.gmra.mxu0 %v271
    %v2222 = vpop.f32.mrf.mxu0
    %v2223 = vadd.f32 %v2209, %v2222
    %v2224 = vpop.f32.mrf.mxu0
    %v2225 = vadd.f32 %v2211, %v2224
    %2226 = vdwg.mxu0
    %2227 = vmatpush.bf16.msra.mxu0 %v1629
    %2228 = vmatpush.bf16.msra.mxu0 %v1623
    %2229 = vmatpush.bf16.msra.mxu0 %v1617
    %2230 = vmatpush.bf16.msra.mxu0 %v1611
    %2231 = vmatpush.bf16.msra.mxu0 %v1605
    %2232 = vmatpush.bf16.msra.mxu0 %v1599
    %2233 = vmatpush.bf16.msra.mxu0 %v1593
    %2234 = vmatpush.bf16.msra.mxu0 %v1587
    %2235 = vmatmul.bf16.gmra.mxu0 %v272
    %v2236 = vpop.f32.mrf.mxu0
    %v2237 = vadd.f32 %v2223, %v2236
    %v2238 = vpop.f32.mrf.mxu0
    %v2239 = vadd.f32 %v2225, %v2238
    %2240 = vdwg.mxu0
    %2241 = vmatpush.bf16.msra.mxu0 %v1677
    %2242 = vmatpush.bf16.msra.mxu0 %v1671
    %2243 = vmatpush.bf16.msra.mxu0 %v1665
    %2244 = vmatpush.bf16.msra.mxu0 %v1659
    %2245 = vmatpush.bf16.msra.mxu0 %v1653
    %2246 = vmatpush.bf16.msra.mxu0 %v1647
    %2247 = vmatpush.bf16.msra.mxu0 %v1641
    %2248 = vmatpush.bf16.msra.mxu0 %v1635
    %2249 = vmatmul.bf16.gmra.mxu0 %v273
    %v2250 = vpop.f32.mrf.mxu0
    %v2251 = vadd.f32 %v2237, %v2250
    %v2252 = vpop.f32.mrf.mxu0
    %v2253 = vadd.f32 %v2239, %v2252
    %2254 = vdwg.mxu0
    %2255 = vmatpush.bf16.msra.mxu0 %v1725
    %2256 = vmatpush.bf16.msra.mxu0 %v1719
    %2257 = vmatpush.bf16.msra.mxu0 %v1713
    %2258 = vmatpush.bf16.msra.mxu0 %v1707
    %2259 = vmatpush.bf16.msra.mxu0 %v1701
    %2260 = vmatpush.bf16.msra.mxu0 %v1695
    %2261 = vmatpush.bf16.msra.mxu0 %v1689
    %2262 = vmatpush.bf16.msra.mxu0 %v1683
    %2263 = vmatmul.bf16.gmra.mxu0 %v274
    %v2264 = vpop.f32.mrf.mxu0
    %v2265 = vadd.f32 %v2251, %v2264
    %v2266 = vpop.f32.mrf.mxu0
    %v2267 = vadd.f32 %v2253, %v2266
    %2268 = vdwg.mxu0
    %2269 = vmatpush.bf16.msra.mxu0 %v1486
    %2270 = vmatpush.bf16.msra.mxu0 %v1480
    %2271 = vmatpush.bf16.msra.mxu0 %v1474
    %2272 = vmatpush.bf16.msra.mxu0 %v1468
    %2273 = vmatpush.bf16.msra.mxu0 %v1462
    %2274 = vmatpush.bf16.msra.mxu0 %v1456
    %2275 = vmatpush.bf16.msra.mxu0 %v1450
    %2276 = vmatpush.bf16.msra.mxu0 %v1444
    %2277 = vmatmul.bf16.gmra.mxu0 %v269
    %v2278 = vpop.f32.mrf.mxu0
    %v2279 = vadd.f32 %v568, %v2278
    %v2280 = vpop.f32.mrf.mxu0
    %v2281 = vadd.f32 %v568, %v2280
    %2282 = vdwg.mxu0
    %2283 = vmatpush.bf16.msra.mxu0 %v1534
    %2284 = vmatpush.bf16.msra.mxu0 %v1528
    %2285 = vmatpush.bf16.msra.mxu0 %v1522
    %2286 = vmatpush.bf16.msra.mxu0 %v1516
    %2287 = vmatpush.bf16.msra.mxu0 %v1510
    %2288 = vmatpush.bf16.msra.mxu0 %v1504
    %2289 = vmatpush.bf16.msra.mxu0 %v1498
    %2290 = vmatpush.bf16.msra.mxu0 %v1492
    %2291 = vmatmul.bf16.gmra.mxu0 %v270
    %v2292 = vpop.f32.mrf.mxu0
    %v2293 = vadd.f32 %v2279, %v2292
    %v2294 = vpop.f32.mrf.mxu0
    %v2295 = vadd.f32 %v2281, %v2294
    %2296 = vdwg.mxu0
    %2297 = vmatpush.bf16.msra.mxu0 %v1582
    %2298 = vmatpush.bf16.msra.mxu0 %v1576
    %2299 = vmatpush.bf16.msra.mxu0 %v1570
    %2300 = vmatpush.bf16.msra.mxu0 %v1564
    %2301 = vmatpush.bf16.msra.mxu0 %v1558
    %2302 = vmatpush.bf16.msra.mxu0 %v1552
    %2303 = vmatpush.bf16.msra.mxu0 %v1546
    %2304 = vmatpush.bf16.msra.mxu0 %v1540
    %2305 = vmatmul.bf16.gmra.mxu0 %v271
    %v2306 = vpop.f32.mrf.mxu0
    %v2307 = vadd.f32 %v2293, %v2306
    %v2308 = vpop.f32.mrf.mxu0
    %v2309 = vadd.f32 %v2295, %v2308
    %2310 = vdwg.mxu0
    %2311 = vmatpush.bf16.msra.mxu0 %v1630
    %2312 = vmatpush.bf16.msra.mxu0 %v1624
    %2313 = vmatpush.bf16.msra.mxu0 %v1618
    %2314 = vmatpush.bf16.msra.mxu0 %v1612
    %2315 = vmatpush.bf16.msra.mxu0 %v1606
    %2316 = vmatpush.bf16.msra.mxu0 %v1600
    %2317 = vmatpush.bf16.msra.mxu0 %v1594
    %2318 = vmatpush.bf16.msra.mxu0 %v1588
    %2319 = vmatmul.bf16.gmra.mxu0 %v272
    %v2320 = vpop.f32.mrf.mxu0
    %v2321 = vadd.f32 %v2307, %v2320
    %v2322 = vpop.f32.mrf.mxu0
    %v2323 = vadd.f32 %v2309, %v2322
    %2324 = vdwg.mxu0
    %2325 = vmatpush.bf16.msra.mxu0 %v1678
    %2326 = vmatpush.bf16.msra.mxu0 %v1672
    %2327 = vmatpush.bf16.msra.mxu0 %v1666
    %2328 = vmatpush.bf16.msra.mxu0 %v1660
    %2329 = vmatpush.bf16.msra.mxu0 %v1654
    %2330 = vmatpush.bf16.msra.mxu0 %v1648
    %2331 = vmatpush.bf16.msra.mxu0 %v1642
    %2332 = vmatpush.bf16.msra.mxu0 %v1636
    %2333 = vmatmul.bf16.gmra.mxu0 %v273
    %v2334 = vpop.f32.mrf.mxu0
    %v2335 = vadd.f32 %v2321, %v2334
    %v2336 = vpop.f32.mrf.mxu0
    %v2337 = vadd.f32 %v2323, %v2336
    %2338 = vdwg.mxu0
    %2339 = vmatpush.bf16.msra.mxu0 %v1726
    %2340 = vmatpush.bf16.msra.mxu0 %v1720
    %2341 = vmatpush.bf16.msra.mxu0 %v1714
    %2342 = vmatpush.bf16.msra.mxu0 %v1708
    %2343 = vmatpush.bf16.msra.mxu0 %v1702
    %2344 = vmatpush.bf16.msra.mxu0 %v1696
    %2345 = vmatpush.bf16.msra.mxu0 %v1690
    %2346 = vmatpush.bf16.msra.mxu0 %v1684
    %2347 = vmatmul.bf16.gmra.mxu0 %v274
    %v2348 = vpop.f32.mrf.mxu0
    %v2349 = vadd.f32 %v2335, %v2348
    %v2350 = vpop.f32.mrf.mxu0
    %v2351 = vadd.f32 %v2337, %v2350
    %2352 = vdwg.mxu0
    %2353 = vmatpush.bf16.msra.mxu0 %v1487
    %2354 = vmatpush.bf16.msra.mxu0 %v1481
    %2355 = vmatpush.bf16.msra.mxu0 %v1475
    %2356 = vmatpush.bf16.msra.mxu0 %v1469
    %2357 = vmatpush.bf16.msra.mxu0 %v1463
    %2358 = vmatpush.bf16.msra.mxu0 %v1457
    %2359 = vmatpush.bf16.msra.mxu0 %v1451
    %2360 = vmatpush.bf16.msra.mxu0 %v1445
    %2361 = vmatmul.bf16.gmra.mxu0 %v269
    %v2362 = vpop.f32.mrf.mxu0
    %v2363 = vadd.f32 %v569, %v2362
    %v2364 = vpop.f32.mrf.mxu0
    %v2365 = vadd.f32 %v569, %v2364
    %2366 = vdwg.mxu0
    %2367 = vmatpush.bf16.msra.mxu0 %v1535
    %2368 = vmatpush.bf16.msra.mxu0 %v1529
    %2369 = vmatpush.bf16.msra.mxu0 %v1523
    %2370 = vmatpush.bf16.msra.mxu0 %v1517
    %2371 = vmatpush.bf16.msra.mxu0 %v1511
    %2372 = vmatpush.bf16.msra.mxu0 %v1505
    %2373 = vmatpush.bf16.msra.mxu0 %v1499
    %2374 = vmatpush.bf16.msra.mxu0 %v1493
    %2375 = vmatmul.bf16.gmra.mxu0 %v270
    %v2376 = vpop.f32.mrf.mxu0
    %v2377 = vadd.f32 %v2363, %v2376
    %v2378 = vpop.f32.mrf.mxu0
    %v2379 = vadd.f32 %v2365, %v2378
    %2380 = vdwg.mxu0
    %2381 = vmatpush.bf16.msra.mxu0 %v1583
    %2382 = vmatpush.bf16.msra.mxu0 %v1577
    %2383 = vmatpush.bf16.msra.mxu0 %v1571
    %2384 = vmatpush.bf16.msra.mxu0 %v1565
    %2385 = vmatpush.bf16.msra.mxu0 %v1559
    %2386 = vmatpush.bf16.msra.mxu0 %v1553
    %2387 = vmatpush.bf16.msra.mxu0 %v1547
    %2388 = vmatpush.bf16.msra.mxu0 %v1541
    %2389 = vmatmul.bf16.gmra.mxu0 %v271
    %v2390 = vpop.f32.mrf.mxu0
    %v2391 = vadd.f32 %v2377, %v2390
    %v2392 = vpop.f32.mrf.mxu0
    %v2393 = vadd.f32 %v2379, %v2392
    %2394 = vdwg.mxu0
    %2395 = vmatpush.bf16.msra.mxu0 %v1631
    %2396 = vmatpush.bf16.msra.mxu0 %v1625
    %2397 = vmatpush.bf16.msra.mxu0 %v1619
    %2398 = vmatpush.bf16.msra.mxu0 %v1613
    %2399 = vmatpush.bf16.msra.mxu0 %v1607
    %2400 = vmatpush.bf16.msra.mxu0 %v1601
    %2401 = vmatpush.bf16.msra.mxu0 %v1595
    %2402 = vmatpush.bf16.msra.mxu0 %v1589
    %2403 = vmatmul.bf16.gmra.mxu0 %v272
    %v2404 = vpop.f32.mrf.mxu0
    %v2405 = vadd.f32 %v2391, %v2404
    %v2406 = vpop.f32.mrf.mxu0
    %v2407 = vadd.f32 %v2393, %v2406
    %2408 = vdwg.mxu0
    %2409 = vmatpush.bf16.msra.mxu0 %v1679
    %2410 = vmatpush.bf16.msra.mxu0 %v1673
    %2411 = vmatpush.bf16.msra.mxu0 %v1667
    %2412 = vmatpush.bf16.msra.mxu0 %v1661
    %2413 = vmatpush.bf16.msra.mxu0 %v1655
    %2414 = vmatpush.bf16.msra.mxu0 %v1649
    %2415 = vmatpush.bf16.msra.mxu0 %v1643
    %2416 = vmatpush.bf16.msra.mxu0 %v1637
    %2417 = vmatmul.bf16.gmra.mxu0 %v273
    %v2418 = vpop.f32.mrf.mxu0
    %v2419 = vadd.f32 %v2405, %v2418
    %v2420 = vpop.f32.mrf.mxu0
    %v2421 = vadd.f32 %v2407, %v2420
    %2422 = vdwg.mxu0
    %2423 = vmatpush.bf16.msra.mxu0 %v1727
    %2424 = vmatpush.bf16.msra.mxu0 %v1721
    %2425 = vmatpush.bf16.msra.mxu0 %v1715
    %2426 = vmatpush.bf16.msra.mxu0 %v1709
    %2427 = vmatpush.bf16.msra.mxu0 %v1703
    %2428 = vmatpush.bf16.msra.mxu0 %v1697
    %2429 = vmatpush.bf16.msra.mxu0 %v1691
    %2430 = vmatpush.bf16.msra.mxu0 %v1685
    %2431 = vmatmul.bf16.gmra.mxu0 %v274
    %v2432 = vpop.f32.mrf.mxu0
    %v2433 = vadd.f32 %v2419, %v2432
    %v2434 = vpop.f32.mrf.mxu0
    %v2435 = vadd.f32 %v2421, %v2434
    %2436 = vdwg.mxu0
    %2437 = vmatpush.bf16.msra.mxu0 %v1488
    %2438 = vmatpush.bf16.msra.mxu0 %v1482
    %2439 = vmatpush.bf16.msra.mxu0 %v1476
    %2440 = vmatpush.bf16.msra.mxu0 %v1470
    %2441 = vmatpush.bf16.msra.mxu0 %v1464
    %2442 = vmatpush.bf16.msra.mxu0 %v1458
    %2443 = vmatpush.bf16.msra.mxu0 %v1452
    %2444 = vmatpush.bf16.msra.mxu0 %v1446
    %2445 = vmatmul.bf16.gmra.mxu0 %v269
    %v2446 = vpop.f32.mrf.mxu0
    %v2447 = vadd.f32 %v570, %v2446
    %v2448 = vpop.f32.mrf.mxu0
    %v2449 = vadd.f32 %v570, %v2448
    %2450 = vdwg.mxu0
    %2451 = vmatpush.bf16.msra.mxu0 %v1536
    %2452 = vmatpush.bf16.msra.mxu0 %v1530
    %2453 = vmatpush.bf16.msra.mxu0 %v1524
    %2454 = vmatpush.bf16.msra.mxu0 %v1518
    %2455 = vmatpush.bf16.msra.mxu0 %v1512
    %2456 = vmatpush.bf16.msra.mxu0 %v1506
    %2457 = vmatpush.bf16.msra.mxu0 %v1500
    %2458 = vmatpush.bf16.msra.mxu0 %v1494
    %2459 = vmatmul.bf16.gmra.mxu0 %v270
    %v2460 = vpop.f32.mrf.mxu0
    %v2461 = vadd.f32 %v2447, %v2460
    %v2462 = vpop.f32.mrf.mxu0
    %v2463 = vadd.f32 %v2449, %v2462
    %2464 = vdwg.mxu0
    %2465 = vmatpush.bf16.msra.mxu0 %v1584
    %2466 = vmatpush.bf16.msra.mxu0 %v1578
    %2467 = vmatpush.bf16.msra.mxu0 %v1572
    %2468 = vmatpush.bf16.msra.mxu0 %v1566
    %2469 = vmatpush.bf16.msra.mxu0 %v1560
    %2470 = vmatpush.bf16.msra.mxu0 %v1554
    %2471 = vmatpush.bf16.msra.mxu0 %v1548
    %2472 = vmatpush.bf16.msra.mxu0 %v1542
    %2473 = vmatmul.bf16.gmra.mxu0 %v271
    %v2474 = vpop.f32.mrf.mxu0
    %v2475 = vadd.f32 %v2461, %v2474
    %v2476 = vpop.f32.mrf.mxu0
    %v2477 = vadd.f32 %v2463, %v2476
    %2478 = vdwg.mxu0
    %2479 = vmatpush.bf16.msra.mxu0 %v1632
    %2480 = vmatpush.bf16.msra.mxu0 %v1626
    %2481 = vmatpush.bf16.msra.mxu0 %v1620
    %2482 = vmatpush.bf16.msra.mxu0 %v1614
    %2483 = vmatpush.bf16.msra.mxu0 %v1608
    %2484 = vmatpush.bf16.msra.mxu0 %v1602
    %2485 = vmatpush.bf16.msra.mxu0 %v1596
    %2486 = vmatpush.bf16.msra.mxu0 %v1590
    %2487 = vmatmul.bf16.gmra.mxu0 %v272
    %v2488 = vpop.f32.mrf.mxu0
    %v2489 = vadd.f32 %v2475, %v2488
    %v2490 = vpop.f32.mrf.mxu0
    %v2491 = vadd.f32 %v2477, %v2490
    %2492 = vdwg.mxu0
    %2493 = vmatpush.bf16.msra.mxu0 %v1680
    %2494 = vmatpush.bf16.msra.mxu0 %v1674
    %2495 = vmatpush.bf16.msra.mxu0 %v1668
    %2496 = vmatpush.bf16.msra.mxu0 %v1662
    %2497 = vmatpush.bf16.msra.mxu0 %v1656
    %2498 = vmatpush.bf16.msra.mxu0 %v1650
    %2499 = vmatpush.bf16.msra.mxu0 %v1644
    %2500 = vmatpush.bf16.msra.mxu0 %v1638
    %2501 = vmatmul.bf16.gmra.mxu0 %v273
    %v2502 = vpop.f32.mrf.mxu0
    %v2503 = vadd.f32 %v2489, %v2502
    %v2504 = vpop.f32.mrf.mxu0
    %v2505 = vadd.f32 %v2491, %v2504
    %2506 = vdwg.mxu0
    %2507 = vmatpush.bf16.msra.mxu0 %v1728
    %2508 = vmatpush.bf16.msra.mxu0 %v1722
    %2509 = vmatpush.bf16.msra.mxu0 %v1716
    %2510 = vmatpush.bf16.msra.mxu0 %v1710
    %2511 = vmatpush.bf16.msra.mxu0 %v1704
    %2512 = vmatpush.bf16.msra.mxu0 %v1698
    %2513 = vmatpush.bf16.msra.mxu0 %v1692
    %2514 = vmatpush.bf16.msra.mxu0 %v1686
    %2515 = vmatmul.bf16.gmra.mxu0 %v274
    %v2516 = vpop.f32.mrf.mxu0
    %v2517 = vadd.f32 %v2503, %v2516
    %v2518 = vpop.f32.mrf.mxu0
    %v2519 = vadd.f32 %v2505, %v2518
    %2520 = vdwg.mxu0
    %v2521 = vpack.c.bf16 %v2181, %v2097
    %v2522 = vpack.c.bf16 %v2349, %v2265
    %v2523 = vpack.c.bf16 %v2517, %v2433
    %v2524 = vpack.c.bf16 %v2183, %v2099
    %v2525 = vpack.c.bf16 %v2351, %v2267
    %v2526 = vpack.c.bf16 %v2519, %v2435
    %v2527 = vunpack.c.l.bf16 %v2521
    %v2528 = vunpack.c.h.bf16 %v2521
    %v2529 = vunpack.c.l.bf16 %v2522
    %v2530 = vunpack.c.h.bf16 %v2522
    %v2531 = vunpack.c.l.bf16 %v2523
    %v2532 = vunpack.c.h.bf16 %v2523
    %v2533 = vunpack.c.l.bf16 %v2524
    %v2534 = vunpack.c.h.bf16 %v2524
    %v2535 = vunpack.c.l.bf16 %v2525
    %v2536 = vunpack.c.h.bf16 %v2525
    %v2537 = vunpack.c.l.bf16 %v2526
    %v2538 = vunpack.c.h.bf16 %v2526
    %v2539 = vmul.f32 %v2527, 0.010009766
    %v2540 = vmul.f32 %v2528, 0.010009766
    %v2541 = vmul.f32 %v2529, 0.010009766
    %v2542 = vmul.f32 %v2530, 0.010009766
    %v2543 = vmul.f32 %v2531, 0.010009766
    %v2544 = vmul.f32 %v2532, 0.010009766
    %v2545 = vmul.f32 %v2533, 0.010009766
    %v2546 = vmul.f32 %v2534, 0.010009766
    %v2547 = vmul.f32 %v2535, 0.010009766
    %v2548 = vmul.f32 %v2536, 0.010009766
    %v2549 = vmul.f32 %v2537, 0.010009766
    %v2550 = vmul.f32 %v2538, 0.010009766
    %v2551 = vpack.c.bf16 %v2540, %v2539
    %v2552 = vpack.c.bf16 %v2542, %v2541
    %v2553 = vpack.c.bf16 %v2544, %v2543
    %v2554 = vpack.c.bf16 %v2546, %v2545
    %v2555 = vpack.c.bf16 %v2548, %v2547
    %v2556 = vpack.c.bf16 %v2550, %v2549
    %v2557 = vunpack.c.l.bf16 %v2551
    %v2558 = vunpack.c.h.bf16 %v2551
    %v2559 = vunpack.c.l.bf16 %v2552
    %v2560 = vunpack.c.h.bf16 %v2552
    %v2561 = vunpack.c.l.bf16 %v2553
    %v2562 = vunpack.c.h.bf16 %v2553
    %v2563 = vunpack.c.l.bf16 %v2554
    %v2564 = vunpack.c.h.bf16 %v2554
    %v2565 = vunpack.c.l.bf16 %v2555
    %v2566 = vunpack.c.h.bf16 %v2555
    %v2567 = vunpack.c.l.bf16 %v2556
    %v2568 = vunpack.c.h.bf16 %v2556
    %v2569 = vmax.f32 %v2527, %v2557
    %v2570 = vmax.f32 %v2528, %v2558
    %v2571 = vmax.f32 %v2529, %v2559
    %v2572 = vmax.f32 %v2530, %v2560
    %v2573 = vmax.f32 %v2531, %v2561
    %v2574 = vmax.f32 %v2532, %v2562
    %v2575 = vmax.f32 %v2533, %v2563
    %v2576 = vmax.f32 %v2534, %v2564
    %v2577 = vmax.f32 %v2535, %v2565
    %v2578 = vmax.f32 %v2536, %v2566
    %v2579 = vmax.f32 %v2537, %v2567
    %v2580 = vmax.f32 %v2538, %v2568
    %v2581 = vpack.c.bf16 %v2575, %v2569
    %v2582 = vpack.c.bf16 %v2576, %v2570
    %v2583 = vpack.c.bf16 %v2577, %v2571
    %v2584 = vpack.c.bf16 %v2578, %v2572
    %v2585 = vpack.c.bf16 %v2579, %v2573
    %v2586 = vpack.c.bf16 %v2580, %v2574
    %v2587 = vld [vmem:[%s5] sm:$0xf]
    %v2588 = vld [vmem:[%s5 + $0x4] sm:$0xf]
    %v2589 = vld [vmem:[%s5 + $0x8] sm:$0xf]
    %v2590 = vld [vmem:[%s5 + $0xc] sm:$0xf]
    %v2591 = vld [vmem:[%s5 + $0x10] sm:$0xf]
    %v2592 = vld [vmem:[%s5 + $0x14] sm:$0xf]
    %v2593 = vld [vmem:[%s5 + $0x18] sm:$0xf]
    %v2594 = vld [vmem:[%s5 + $0x1c] sm:$0xf]
    %v2595 = vld [vmem:[%s5 + $0x20] sm:$0xf]
    %v2596 = vld [vmem:[%s5 + $0x24] sm:$0xf]
    %v2597 = vld [vmem:[%s5 + $0x28] sm:$0xf]
    %v2598 = vld [vmem:[%s5 + $0x2c] sm:$0xf]
    %v2599 = vld [vmem:[%s5 + $0x30] sm:$0xf]
    %v2600 = vld [vmem:[%s5 + $0x34] sm:$0xf]
    %v2601 = vld [vmem:[%s5 + $0x38] sm:$0xf]
    %v2602 = vld [vmem:[%s5 + $0x3c] sm:$0xf]
    %v2603 = vld [vmem:[%s5 + $0x40] sm:$0xf]
    %v2604 = vld [vmem:[%s5 + $0x44] sm:$0xf]
    %v2605 = vld [vmem:[%s5 + $0x48] sm:$0xf]
    %v2606 = vld [vmem:[%s5 + $0x4c] sm:$0xf]
    %v2607 = vld [vmem:[%s5 + $0x50] sm:$0xf]
    %v2608 = vld [vmem:[%s5 + $0x54] sm:$0xf]
    %v2609 = vld [vmem:[%s5 + $0x58] sm:$0xf]
    %v2610 = vld [vmem:[%s5 + $0x5c] sm:$0xf]
    %v2611 = vld [vmem:[%s5 + $0x60] sm:$0xf]
    %v2612 = vld [vmem:[%s5 + $0x64] sm:$0xf]
    %v2613 = vld [vmem:[%s5 + $0x68] sm:$0xf]
    %v2614 = vld [vmem:[%s5 + $0x6c] sm:$0xf]
    %v2615 = vld [vmem:[%s5 + $0x70] sm:$0xf]
    %v2616 = vld [vmem:[%s5 + $0x74] sm:$0xf]
    %v2617 = vld [vmem:[%s5 + $0x78] sm:$0xf]
    %v2618 = vld [vmem:[%s5 + $0x7c] sm:$0xf]
    %v2619 = vld [vmem:[%s5 + $0x80] sm:$0xf]
    %v2620 = vld [vmem:[%s5 + $0x84] sm:$0xf]
    %v2621 = vld [vmem:[%s5 + $0x88] sm:$0xf]
    %v2622 = vld [vmem:[%s5 + $0x8c] sm:$0xf]
    %v2623 = vld [vmem:[%s5 + $0x90] sm:$0xf]
    %v2624 = vld [vmem:[%s5 + $0x94] sm:$0xf]
    %v2625 = vld [vmem:[%s5 + $0x98] sm:$0xf]
    %v2626 = vld [vmem:[%s5 + $0x9c] sm:$0xf]
    %v2627 = vld [vmem:[%s5 + $0xa0] sm:$0xf]
    %v2628 = vld [vmem:[%s5 + $0xa4] sm:$0xf]
    %v2629 = vld [vmem:[%s5 + $0xa8] sm:$0xf]
    %v2630 = vld [vmem:[%s5 + $0xac] sm:$0xf]
    %v2631 = vld [vmem:[%s5 + $0xb0] sm:$0xf]
    %v2632 = vld [vmem:[%s5 + $0xb4] sm:$0xf]
    %v2633 = vld [vmem:[%s5 + $0xb8] sm:$0xf]
    %v2634 = vld [vmem:[%s5 + $0xbc] sm:$0xf]
    %v2635 = vld [vmem:[%s5 + $0xc0] sm:$0xf]
    %v2636 = vld [vmem:[%s5 + $0xc4] sm:$0xf]
    %v2637 = vld [vmem:[%s5 + $0xc8] sm:$0xf]
    %v2638 = vld [vmem:[%s5 + $0xcc] sm:$0xf]
    %v2639 = vld [vmem:[%s5 + $0xd0] sm:$0xf]
    %v2640 = vld [vmem:[%s5 + $0xd4] sm:$0xf]
    %v2641 = vld [vmem:[%s5 + $0xd8] sm:$0xf]
    %v2642 = vld [vmem:[%s5 + $0xdc] sm:$0xf]
    %v2643 = vld [vmem:[%s5 + $0xe0] sm:$0xf]
    %v2644 = vld [vmem:[%s5 + $0xe4] sm:$0xf]
    %v2645 = vld [vmem:[%s5 + $0xe8] sm:$0xf]
    %v2646 = vld [vmem:[%s5 + $0xec] sm:$0xf]
    %v2647 = vld [vmem:[%s5 + $0xf0] sm:$0xf]
    %v2648 = vld [vmem:[%s5 + $0xf4] sm:$0xf]
    %v2649 = vld [vmem:[%s5 + $0xf8] sm:$0xf]
    %v2650 = vld [vmem:[%s5 + $0xfc] sm:$0xf]
    %v2651 = vld [vmem:[%s5 + $0x100] sm:$0xf]
    %v2652 = vld [vmem:[%s5 + $0x104] sm:$0xf]
    %v2653 = vld [vmem:[%s5 + $0x108] sm:$0xf]
    %v2654 = vld [vmem:[%s5 + $0x10c] sm:$0xf]
    %v2655 = vld [vmem:[%s5 + $0x110] sm:$0xf]
    %v2656 = vld [vmem:[%s5 + $0x114] sm:$0xf]
    %v2657 = vld [vmem:[%s5 + $0x118] sm:$0xf]
    %v2658 = vld [vmem:[%s5 + $0x11c] sm:$0xf]
    %v2659 = vld [vmem:[%s5 + $0x120] sm:$0xf]
    %v2660 = vld [vmem:[%s5 + $0x124] sm:$0xf]
    %v2661 = vld [vmem:[%s5 + $0x128] sm:$0xf]
    %v2662 = vld [vmem:[%s5 + $0x12c] sm:$0xf]
    %v2663 = vld [vmem:[%s5 + $0x130] sm:$0xf]
    %v2664 = vld [vmem:[%s5 + $0x134] sm:$0xf]
    %v2665 = vld [vmem:[%s5 + $0x138] sm:$0xf]
    %v2666 = vld [vmem:[%s5 + $0x13c] sm:$0xf]
    %v2667 = vld [vmem:[%s5 + $0x140] sm:$0xf]
    %v2668 = vld [vmem:[%s5 + $0x144] sm:$0xf]
    %v2669 = vld [vmem:[%s5 + $0x148] sm:$0xf]
    %v2670 = vld [vmem:[%s5 + $0x14c] sm:$0xf]
    %v2671 = vld [vmem:[%s5 + $0x150] sm:$0xf]
    %v2672 = vld [vmem:[%s5 + $0x154] sm:$0xf]
    %v2673 = vld [vmem:[%s5 + $0x158] sm:$0xf]
    %v2674 = vld [vmem:[%s5 + $0x15c] sm:$0xf]
    %v2675 = vld [vmem:[%s5 + $0x160] sm:$0xf]
    %v2676 = vld [vmem:[%s5 + $0x164] sm:$0xf]
    %v2677 = vld [vmem:[%s5 + $0x168] sm:$0xf]
    %v2678 = vld [vmem:[%s5 + $0x16c] sm:$0xf]
    %v2679 = vld [vmem:[%s5 + $0x170] sm:$0xf]
    %v2680 = vld [vmem:[%s5 + $0x174] sm:$0xf]
    %v2681 = vld [vmem:[%s5 + $0x178] sm:$0xf]
    %v2682 = vld [vmem:[%s5 + $0x17c] sm:$0xf]
    %v2683 = vld [vmem:[%s6] sm:$0x1]
    %v2685 = vperm.slane %v2683, 0
    %v2783 = vunpack.c.l.b16 %v2587
    %v2784 = vunpack.c.l.b16 %v2588
    %v2785 = vunpack.c.l.b16 %v2589
    %v2786 = vunpack.c.l.b16 %v2590
    %v2787 = vunpack.c.l.b16 %v2591
    %v2788 = vunpack.c.l.b16 %v2592
    %v2789 = vunpack.c.l.b16 %v2593
    %v2790 = vunpack.c.l.b16 %v2594
    %v2791 = vunpack.c.l.b16 %v2595
    %v2792 = vunpack.c.l.b16 %v2596
    %v2793 = vunpack.c.l.b16 %v2597
    %v2794 = vunpack.c.l.b16 %v2598
    %v2795 = vunpack.c.l.b16 %v2599
    %v2796 = vunpack.c.l.b16 %v2600
    %v2797 = vunpack.c.l.b16 %v2601
    %v2798 = vunpack.c.l.b16 %v2602
    %v2799 = vunpack.c.l.b16 %v2603
    %v2800 = vunpack.c.l.b16 %v2604
    %v2801 = vunpack.c.l.b16 %v2605
    %v2802 = vunpack.c.l.b16 %v2606
    %v2803 = vunpack.c.l.b16 %v2607
    %v2804 = vunpack.c.l.b16 %v2608
    %v2805 = vunpack.c.l.b16 %v2609
    %v2806 = vunpack.c.l.b16 %v2610
    %v2807 = vunpack.c.l.b16 %v2611
    %v2808 = vunpack.c.l.b16 %v2612
    %v2809 = vunpack.c.l.b16 %v2613
    %v2810 = vunpack.c.l.b16 %v2614
    %v2811 = vunpack.c.l.b16 %v2615
    %v2812 = vunpack.c.l.b16 %v2616
    %v2813 = vunpack.c.l.b16 %v2617
    %v2814 = vunpack.c.l.b16 %v2618
    %v2815 = vunpack.c.l.b16 %v2619
    %v2816 = vunpack.c.l.b16 %v2620
    %v2817 = vunpack.c.l.b16 %v2621
    %v2818 = vunpack.c.l.b16 %v2622
    %v2819 = vunpack.c.l.b16 %v2623
    %v2820 = vunpack.c.l.b16 %v2624
    %v2821 = vunpack.c.l.b16 %v2625
    %v2822 = vunpack.c.l.b16 %v2626
    %v2823 = vunpack.c.l.b16 %v2627
    %v2824 = vunpack.c.l.b16 %v2628
    %v2825 = vunpack.c.l.b16 %v2629
    %v2826 = vunpack.c.l.b16 %v2630
    %v2827 = vunpack.c.l.b16 %v2631
    %v2828 = vunpack.c.l.b16 %v2632
    %v2829 = vunpack.c.l.b16 %v2633
    %v2830 = vunpack.c.l.b16 %v2634
    %v2831 = vunpack.c.l.b16 %v2635
    %v2832 = vunpack.c.l.b16 %v2636
    %v2833 = vunpack.c.l.b16 %v2637
    %v2834 = vunpack.c.l.b16 %v2638
    %v2835 = vunpack.c.l.b16 %v2639
    %v2836 = vunpack.c.l.b16 %v2640
    %v2837 = vunpack.c.l.b16 %v2641
    %v2838 = vunpack.c.l.b16 %v2642
    %v2839 = vunpack.c.l.b16 %v2643
    %v2840 = vunpack.c.l.b16 %v2644
    %v2841 = vunpack.c.l.b16 %v2645
    %v2842 = vunpack.c.l.b16 %v2646
    %v2843 = vunpack.c.l.b16 %v2647
    %v2844 = vunpack.c.l.b16 %v2648
    %v2845 = vunpack.c.l.b16 %v2649
    %v2846 = vunpack.c.l.b16 %v2650
    %v2847 = vunpack.c.l.b16 %v2651
    %v2848 = vunpack.c.l.b16 %v2652
    %v2849 = vunpack.c.l.b16 %v2653
    %v2850 = vunpack.c.l.b16 %v2654
    %v2851 = vunpack.c.l.b16 %v2655
    %v2852 = vunpack.c.l.b16 %v2656
    %v2853 = vunpack.c.l.b16 %v2657
    %v2854 = vunpack.c.l.b16 %v2658
    %v2855 = vunpack.c.l.b16 %v2659
    %v2856 = vunpack.c.l.b16 %v2660
    %v2857 = vunpack.c.l.b16 %v2661
    %v2858 = vunpack.c.l.b16 %v2662
    %v2859 = vunpack.c.l.b16 %v2663
    %v2860 = vunpack.c.l.b16 %v2664
    %v2861 = vunpack.c.l.b16 %v2665
    %v2862 = vunpack.c.l.b16 %v2666
    %v2863 = vunpack.c.l.b16 %v2667
    %v2864 = vunpack.c.l.b16 %v2668
    %v2865 = vunpack.c.l.b16 %v2669
    %v2866 = vunpack.c.l.b16 %v2670
    %v2867 = vunpack.c.l.b16 %v2671
    %v2868 = vunpack.c.l.b16 %v2672
    %v2869 = vunpack.c.l.b16 %v2673
    %v2870 = vunpack.c.l.b16 %v2674
    %v2871 = vunpack.c.l.b16 %v2675
    %v2872 = vunpack.c.l.b16 %v2676
    %v2873 = vunpack.c.l.b16 %v2677
    %v2874 = vunpack.c.l.b16 %v2678
    %v2875 = vunpack.c.l.b16 %v2679
    %v2876 = vunpack.c.l.b16 %v2680
    %v2877 = vunpack.c.l.b16 %v2681
    %v2878 = vunpack.c.l.b16 %v2682
    %v2879 = vpack.c.b16 %v2784, %v2783
    %v2880 = vpack.c.b16 %v2786, %v2785
    %v2881 = vpack.c.b16 %v2788, %v2787
    %v2882 = vpack.c.b16 %v2790, %v2789
    %v2883 = vpack.c.b16 %v2792, %v2791
    %v2884 = vpack.c.b16 %v2794, %v2793
    %v2885 = vpack.c.b16 %v2796, %v2795
    %v2886 = vpack.c.b16 %v2798, %v2797
    %v2887 = vpack.c.b16 %v2800, %v2799
    %v2888 = vpack.c.b16 %v2802, %v2801
    %v2889 = vpack.c.b16 %v2804, %v2803
    %v2890 = vpack.c.b16 %v2806, %v2805
    %v2891 = vpack.c.b16 %v2808, %v2807
    %v2892 = vpack.c.b16 %v2810, %v2809
    %v2893 = vpack.c.b16 %v2812, %v2811
    %v2894 = vpack.c.b16 %v2814, %v2813
    %v2895 = vpack.c.b16 %v2816, %v2815
    %v2896 = vpack.c.b16 %v2818, %v2817
    %v2897 = vpack.c.b16 %v2820, %v2819
    %v2898 = vpack.c.b16 %v2822, %v2821
    %v2899 = vpack.c.b16 %v2824, %v2823
    %v2900 = vpack.c.b16 %v2826, %v2825
    %v2901 = vpack.c.b16 %v2828, %v2827
    %v2902 = vpack.c.b16 %v2830, %v2829
    %v2903 = vpack.c.b16 %v2832, %v2831
    %v2904 = vpack.c.b16 %v2834, %v2833
    %v2905 = vpack.c.b16 %v2836, %v2835
    %v2906 = vpack.c.b16 %v2838, %v2837
    %v2907 = vpack.c.b16 %v2840, %v2839
    %v2908 = vpack.c.b16 %v2842, %v2841
    %v2909 = vpack.c.b16 %v2844, %v2843
    %v2910 = vpack.c.b16 %v2846, %v2845
    %v2911 = vpack.c.b16 %v2848, %v2847
    %v2912 = vpack.c.b16 %v2850, %v2849
    %v2913 = vpack.c.b16 %v2852, %v2851
    %v2914 = vpack.c.b16 %v2854, %v2853
    %v2915 = vpack.c.b16 %v2856, %v2855
    %v2916 = vpack.c.b16 %v2858, %v2857
    %v2917 = vpack.c.b16 %v2860, %v2859
    %v2918 = vpack.c.b16 %v2862, %v2861
    %v2919 = vpack.c.b16 %v2864, %v2863
    %v2920 = vpack.c.b16 %v2866, %v2865
    %v2921 = vpack.c.b16 %v2868, %v2867
    %v2922 = vpack.c.b16 %v2870, %v2869
    %v2923 = vpack.c.b16 %v2872, %v2871
    %v2924 = vpack.c.b16 %v2874, %v2873
    %v2925 = vpack.c.b16 %v2876, %v2875
    %v2926 = vpack.c.b16 %v2878, %v2877
    %2975 = vmatpush.bf16.msra.mxu0 %v2886
    %2976 = vmatpush.bf16.msra.mxu0 %v2885
    %2977 = vmatpush.bf16.msra.mxu0 %v2884
    %2978 = vmatpush.bf16.msra.mxu0 %v2883
    %2979 = vmatpush.bf16.msra.mxu0 %v2882
    %2980 = vmatpush.bf16.msra.mxu0 %v2881
    %2981 = vmatpush.bf16.msra.mxu0 %v2880
    %2982 = vmatpush.bf16.msra.mxu0 %v2879
    %2983 = vmatmul.bf16.gmra.mxu0 %v2581
    %v2984 = vpop.f32.mrf.mxu0
    %v2985 = vadd.f32 %v2685, %v2984
    %v2986 = vpop.f32.mrf.mxu0
    %v2987 = vadd.f32 %v2685, %v2986
    %2988 = vdwg.mxu0
    %2989 = vmatpush.bf16.msra.mxu0 %v2894
    %2990 = vmatpush.bf16.msra.mxu0 %v2893
    %2991 = vmatpush.bf16.msra.mxu0 %v2892
    %2992 = vmatpush.bf16.msra.mxu0 %v2891
    %2993 = vmatpush.bf16.msra.mxu0 %v2890
    %2994 = vmatpush.bf16.msra.mxu0 %v2889
    %2995 = vmatpush.bf16.msra.mxu0 %v2888
    %2996 = vmatpush.bf16.msra.mxu0 %v2887
    %2997 = vmatmul.bf16.gmra.mxu0 %v2582
    %v2998 = vpop.f32.mrf.mxu0
    %v2999 = vadd.f32 %v2985, %v2998
    %v3000 = vpop.f32.mrf.mxu0
    %v3001 = vadd.f32 %v2987, %v3000
    %3002 = vdwg.mxu0
    %3003 = vmatpush.bf16.msra.mxu0 %v2902
    %3004 = vmatpush.bf16.msra.mxu0 %v2901
    %3005 = vmatpush.bf16.msra.mxu0 %v2900
    %3006 = vmatpush.bf16.msra.mxu0 %v2899
    %3007 = vmatpush.bf16.msra.mxu0 %v2898
    %3008 = vmatpush.bf16.msra.mxu0 %v2897
    %3009 = vmatpush.bf16.msra.mxu0 %v2896
    %3010 = vmatpush.bf16.msra.mxu0 %v2895
    %3011 = vmatmul.bf16.gmra.mxu0 %v2583
    %v3012 = vpop.f32.mrf.mxu0
    %v3013 = vadd.f32 %v2999, %v3012
    %v3014 = vpop.f32.mrf.mxu0
    %v3015 = vadd.f32 %v3001, %v3014
    %3016 = vdwg.mxu0
    %3017 = vmatpush.bf16.msra.mxu0 %v2910
    %3018 = vmatpush.bf16.msra.mxu0 %v2909
    %3019 = vmatpush.bf16.msra.mxu0 %v2908
    %3020 = vmatpush.bf16.msra.mxu0 %v2907
    %3021 = vmatpush.bf16.msra.mxu0 %v2906
    %3022 = vmatpush.bf16.msra.mxu0 %v2905
    %3023 = vmatpush.bf16.msra.mxu0 %v2904
    %3024 = vmatpush.bf16.msra.mxu0 %v2903
    %3025 = vmatmul.bf16.gmra.mxu0 %v2584
    %v3026 = vpop.f32.mrf.mxu0
    %v3027 = vadd.f32 %v3013, %v3026
    %v3028 = vpop.f32.mrf.mxu0
    %v3029 = vadd.f32 %v3015, %v3028
    %3030 = vdwg.mxu0
    %3031 = vmatpush.bf16.msra.mxu0 %v2918
    %3032 = vmatpush.bf16.msra.mxu0 %v2917
    %3033 = vmatpush.bf16.msra.mxu0 %v2916
    %3034 = vmatpush.bf16.msra.mxu0 %v2915
    %3035 = vmatpush.bf16.msra.mxu0 %v2914
    %3036 = vmatpush.bf16.msra.mxu0 %v2913
    %3037 = vmatpush.bf16.msra.mxu0 %v2912
    %3038 = vmatpush.bf16.msra.mxu0 %v2911
    %3039 = vmatmul.bf16.gmra.mxu0 %v2585
    %v3040 = vpop.f32.mrf.mxu0
    %v3041 = vadd.f32 %v3027, %v3040
    %v3042 = vpop.f32.mrf.mxu0
    %v3043 = vadd.f32 %v3029, %v3042
    %3044 = vdwg.mxu0
    %3045 = vmatpush.bf16.msra.mxu0 %v2926
    %3046 = vmatpush.bf16.msra.mxu0 %v2925
    %3047 = vmatpush.bf16.msra.mxu0 %v2924
    %3048 = vmatpush.bf16.msra.mxu0 %v2923
    %3049 = vmatpush.bf16.msra.mxu0 %v2922
    %3050 = vmatpush.bf16.msra.mxu0 %v2921
    %3051 = vmatpush.bf16.msra.mxu0 %v2920
    %3052 = vmatpush.bf16.msra.mxu0 %v2919
    %3053 = vmatmul.bf16.gmra.mxu0 %v2586
    %v3054 = vpop.f32.mrf.mxu0
    %v3055 = vadd.f32 %v3041, %v3054
    %v3056 = vpop.f32.mrf.mxu0
    %v3057 = vadd.f32 %v3043, %v3056
    %3058 = vdwg.mxu0
    %3059 = vmax.xlane.f32.xlu0 %v3055
    %v3060 = vpop.xlane.xlu0 %3059
    %3061 = vmax.xlane.f32.xlu0 %v3057
    %v3062 = vpop.xlane.xlu0 %3061
    %v3063 = vsub.f32 %v3055, %v3060
    %v3064 = vsub.f32 %v3057, %v3062
    %v3065 = vmul.f32 %v3063, 1.442695
    %v3066 = vpow.pop %v3065
    %v3067 = vmul.f32 %v3064, 1.442695
    %v3068 = vpow.pop %v3067
    %3069 = vadd.xlane.f32.xlu0 %v3066
    %v3070 = vpop.xlane.xlu0 %3069
    %3071 = vadd.xlane.f32.xlu0 %v3068
    %v3072 = vpop.xlane.xlu0 %3071
    %v3073 = vrcp.pop %v3070
    %v3074 = vmul.f32 %v3070, %v3073
    %v3075 = vsub.f32 1.0, %v3074
    %v3076 = vmul.f32 %v3073, %v3075
    %v3077 = vadd.f32 %v3073, %v3076
    %vm3078 = vweird.f32 %v3070
    %vm3079 = vweird.f32 %v3073
    %vm3080 = vmor %vm3078, %vm3079
    %v3081 = vsel %vm3080, %v3073, %v3077
    %v3082 = vand.u32 2147483647, %v3070
    %vm3083 = vcmp.eq.f32.partialorder %v3082, 8.507059e+37
    %v3084 = vand.u32 %v3070, 2147483648
    %v3085 = vor.u32 1.1754944e-38, %v3084
    %v3086 = vsel %vm3083, %v3085, %v3081
    %v3087 = vmul.f32 1.0, %v3086
    %v3088 = vrcp.pop %v3072
    %v3089 = vmul.f32 %v3072, %v3088
    %v3090 = vsub.f32 1.0, %v3089
    %v3091 = vmul.f32 %v3088, %v3090
    %v3092 = vadd.f32 %v3088, %v3091
    %vm3093 = vweird.f32 %v3072
    %vm3094 = vweird.f32 %v3088
    %vm3095 = vmor %vm3093, %vm3094
    %v3096 = vsel %vm3095, %v3088, %v3092
    %v3097 = vand.u32 2147483647, %v3072
    %vm3098 = vcmp.eq.f32.partialorder %v3097, 8.507059e+37
    %v3099 = vand.u32 %v3072, 2147483648
    %v3100 = vor.u32 1.1754944e-38, %v3099
    %v3101 = vsel %vm3098, %v3100, %v3096
    %v3102 = vmul.f32 1.0, %v3101
    %v3103 = vmul.f32 %v3066, %v3087
    %v3104 = vmul.f32 %v3068, %v3102
    %3105 = vst [vmem:[#allocation2] sm:$0xff] %v3103
    %3106 = vst [vmem:[#allocation2 + $0x8] sm:$0xff] %v3104
    // Predicated region
    $region30: #{discriminator_forward.1} parent=1 // pred_check
      _
    $region31: #{discriminator_forward.1} parent=1 // pred_check_branch
      %3108 = sbr.rel (0) target = $region33
    $region32: #{discriminator_forward.1} parent=1 // pred_region
      %3110 = vsyncadd [#allocation3], 0
      %s3111 = sshll.u32 [#allocation2], 4
      %s3112 = int_to_ptr.vmem [resolvable:$true] %s3111
      %s3113 = sshll.u32 %s7, 4
      %s3114 = int_to_ptr.hbm [resolvable:$true] %s3113
      %3119 = dma.vmem_to_hbm [thread:$0]  %s3112, 256, %s3114, [#allocation3], 128, 128, 8
    $region33: #{discriminator_forward.1} parent=1 // pred_fallthru
      _
    // Predicated region
    $region34: #{discriminator_forward.1} parent=1 // pred_check
      _
    $region35: #{discriminator_forward.1} parent=1 // pred_check_branch
      %3121 = sbr.rel (0) target = $region37
    $region36: #{discriminator_forward.1} parent=1 // pred_region
      %3123 = dma.done [#allocation3], 256
    $region37: #{discriminator_forward.1} parent=1 // pred_fallthru
      _
    %3124 = vsyncpa [#allocation3], 1

</llo_original>
